<compile_context>
chip_gen: v6e
topology: v6e:2x2x1
jax: 0.10.0
libtpu: 0.0.40
codegen_flags: <defaults>
</compile_context>

<pallas_src>
import functools

import jax
import jax.numpy as jnp
from jax import lax
from jax.experimental import pallas as pl
from jax.experimental.pallas import tpu as pltpu


# ------------------------------- kernel --------------------------------------


def _spatial_ocr_kernel(
    x_ref, p_ref,
    wfp1_ref, wfp2_ref, wfo1_ref, wfo2_ref, wfd_ref, wfu_ref,
    wox_ref, woc_ref, bias_ref,
    o_ref, *, m_valid, kc_pad, c_pad, cout_pad,
):
    f32, bf16 = jnp.float32, jnp.bfloat16

    x = x_ref[...]              # (TN, C_pad)  bf16 pixel tile
    p = p_ref[...]              # (M_pad, C_pad) bf16 proxy block
    biases = bias_ref[...]      # (8, max_w) f32 — grouped per-layer biases

    def lbr(z_bf, w_ref, b):    # ConvBNReLU(1x1) with BN scale folded into W
        y = jnp.dot(z_bf, w_ref[...], preferred_element_type=f32)
        return jnp.maximum(y + b, 0.0)

    b_fp1 = biases[0:1, :kc_pad]
    b_fp2 = biases[1:2, :kc_pad]
    b_fo1 = biases[2:3, :kc_pad]
    b_fo2 = biases[3:4, :kc_pad]
    b_fd = biases[4:5, :kc_pad]
    b_fu = biases[5:6, :c_pad]
    b_out = biases[6:7, :cout_pad]

    # query = f_pixel(x)   (Kc^-0.5 already folded into the 2nd layer)
    q = lbr(lbr(x, wfp1_ref, b_fp1).astype(bf16), wfp2_ref, b_fp2)   # (TN, Kc)
    # key = f_object(proxy), value = f_down(proxy)
    k = lbr(lbr(p, wfo1_ref, b_fo1).astype(bf16), wfo2_ref, b_fo2)   # (Mp, Kc)
    v = lbr(p, wfd_ref, b_fd)                                        # (Mp, Kc)

    # logits: contract last axes of q and k (no explicit k.T / XLU transpose)
    smi = lax.dot_general(
        q.astype(bf16), k.astype(bf16),
        dimension_numbers=(((1,), (1,)), ((), ())),
        preferred_element_type=f32)                                  # (TN, Mp)

    # mask padded proxy columns, then max-subtracted softmax over proxy axis
    col = lax.broadcasted_iota(jnp.int32, smi.shape, 1)
    smi = jnp.where(col < m_valid, smi, jnp.float32(-1e30))
    smi = smi - jnp.max(smi, axis=-1, keepdims=True)
    e = jnp.exp(smi)
    attn = e * pl.reciprocal(jnp.sum(e, axis=-1, keepdims=True), approx=True)

    # context = f_up(attn @ value)
    ctx = jnp.dot(attn.astype(bf16), v.astype(bf16),
                  preferred_element_type=f32)                        # (TN, Kc)
    context = lbr(ctx.astype(bf16), wfu_ref, b_fu)                   # (TN, C)

    # SpatialOCRModule tail: ConvBNReLU(cat([x, context])) -> fused as two
    # matmuls against the split weight.  Dropout(0.05) = identity at inference.
    y = (jnp.dot(x, wox_ref[...], preferred_element_type=f32)
         + jnp.dot(context.astype(bf16), woc_ref[...],
                   preferred_element_type=f32))
    o_ref[...] = jnp.maximum(y + b_out, 0.0)


# ----------------------- param / input preparation ---------------------------


def _round_up(v, m):
    return (v + m - 1) // m * m


def _prepare(feats, proxy, params, tn):
    """Pad channels/proxy to 128 lanes, fold BN + softmax scales, cast to bf16."""
    bs, c, h, w = feats.shape
    _, _, hp, wp = proxy.shape
    n, m = h * w, hp * wp
    fp1, fp2, fo1, fo2, fd, fu, fout = params
    kc = fp1[0].shape[1]
    cout = fout[0].shape[1]

    c_pad = _round_up(c, 128)
    kc_pad = _round_up(kc, 128)
    cout_pad = _round_up(cout, 128)
    m_pad = _round_up(m, 128)
    tn = _round_up(min(tn, _round_up(n, 128)), 128)
    n_pad = _round_up(n, tn)
    max_w = max(kc_pad, c_pad, cout_pad)

    def fold(layer, cin_pad, cout_p, extra=1.0):
        wm, s, b = layer
        wf = wm * (s * extra)[None, :]
        wf = jnp.pad(wf, ((0, cin_pad - wf.shape[0]), (0, cout_p - wf.shape[1])))
        bf = jnp.pad(b * extra, (0, max_w - b.shape[0]))
        return wf.astype(jnp.bfloat16), bf.astype(jnp.float32)

    inv_sqrt_kc = float(kc) ** -0.5
    wfp1, bfp1 = fold(fp1, c_pad, kc_pad)
    wfp2, bfp2 = fold(fp2, kc_pad, kc_pad, extra=inv_sqrt_kc)  # fold Kc^-0.5
    wfo1, bfo1 = fold(fo1, c_pad, kc_pad)
    wfo2, bfo2 = fold(fo2, kc_pad, kc_pad)
    wfd, bfd = fold(fd, c_pad, kc_pad)
    wfu, bfu = fold(fu, kc_pad, c_pad)
    w_out, s_out, b_out = fout
    wox, bout = fold((w_out[:c], s_out, b_out), c_pad, cout_pad)   # feats half
    woc, _ = fold((w_out[c:], s_out, b_out), c_pad, cout_pad)      # context half

    bias = jnp.stack([bfp1, bfp2, bfo1, bfo2, bfd, bfu, bout,
                      jnp.zeros((max_w,), jnp.float32)], axis=0)

    xf = jnp.transpose(feats, (0, 2, 3, 1)).reshape(bs, n, c)
    pf = jnp.transpose(proxy, (0, 2, 3, 1)).reshape(bs, m, c)
    xf = jnp.pad(xf, ((0, 0), (0, n_pad - n), (0, c_pad - c))).astype(jnp.bfloat16)
    pf = jnp.pad(pf, ((0, 0), (0, m_pad - m), (0, c_pad - c))).astype(jnp.bfloat16)

    return dict(x=xf, p=pf,
                weights=(wfp1, wfp2, wfo1, wfo2, wfd, wfu, wox, woc),
                bias=bias, bs=bs, h=h, w=w, n=n, m=m, c=c, cout=cout,
                c_pad=c_pad, kc_pad=kc_pad, cout_pad=cout_pad,
                m_pad=m_pad, n_pad=n_pad, tn=tn)


# ------------------------------- wrapper --------------------------------------


@functools.partial(jax.jit, static_argnames=("tn",))
def spatial_ocr_module(feats, proxy, params, *, tn=512):
    """feats: (bs, C, h, w), proxy: (bs, C, hp, wp) -> (bs, Cout, h, w)."""
    prep = _prepare(feats, proxy, params, tn)
    bs, tn = prep["bs"], prep["tn"]
    n_pad, m_pad = prep["n_pad"], prep["m_pad"]
    c_pad, kc_pad, cout_pad = prep["c_pad"], prep["kc_pad"], prep["cout_pad"]

    kernel = functools.partial(
        _spatial_ocr_kernel, m_valid=prep["m"],
        kc_pad=kc_pad, c_pad=c_pad, cout_pad=cout_pad)

    const_ins = (*prep["weights"], prep["bias"])
    const_specs = [pl.BlockSpec(a.shape, lambda b, t: (0, 0)) for a in const_ins]

    out_pad = pl.pallas_call(
        kernel,
        out_shape=jax.ShapeDtypeStruct((bs, n_pad, cout_pad), jnp.float32),
        grid=(bs, n_pad // tn),
        in_specs=[
            pl.BlockSpec((pl.Squeezed(), tn, c_pad), lambda b, t: (b, t, 0)),
            pl.BlockSpec((pl.Squeezed(), m_pad, c_pad), lambda b, t: (b, 0, 0)),
            *const_specs,
        ],
        out_specs=pl.BlockSpec((pl.Squeezed(), tn, cout_pad),
                               lambda b, t: (b, t, 0)),
        compiler_params=pltpu.CompilerParams(
            dimension_semantics=("parallel", "parallel"),
            vmem_limit_bytes=32 * 1024 * 1024),
    )(prep["x"], prep["p"], *const_ins)

    out = out_pad[:, :prep["n"], :prep["cout"]]
    out = out.reshape(bs, prep["h"], prep["w"], prep["cout"])
    # NCHW boundary kept for PyTorch parity; drop if surrounding model is NHWC.
    return jnp.transpose(out, (0, 3, 1, 2))


# ----------------------- deterministic parameter init -------------------------


def init_params(key, in_channels, key_channels, output_channels):
    """Each ConvBNReLU(1x1) -> (W^T: (cin, cout), bn_scale, bn_bias), eval BN."""
    eps = 1e-5

    def conv_bn(k, cin, cout):
        k1, k2, k3, k4, k5 = jax.random.split(k, 5)
        w = jax.random.normal(k1, (cout, cin), jnp.float32) / jnp.sqrt(float(cin))
        gamma = jax.random.uniform(k2, (cout,), jnp.float32, 0.5, 1.5)
        beta = 0.1 * jax.random.normal(k3, (cout,), jnp.float32)
        mean = 0.1 * jax.random.normal(k4, (cout,), jnp.float32)
        var = jax.random.uniform(k5, (cout,), jnp.float32, 0.5, 1.5)
        scale = gamma / jnp.sqrt(var + eps)
        bias = beta - mean * scale
        return w.T, scale, bias

    keys = jax.random.split(key, 7)
    fp1 = conv_bn(keys[0], in_channels, key_channels)
    fp2 = conv_bn(keys[1], key_channels, key_channels)
    fo1 = conv_bn(keys[2], in_channels, key_channels)
    fo2 = conv_bn(keys[3], key_channels, key_channels)
    fd = conv_bn(keys[4], in_channels, key_channels)
    fu = conv_bn(keys[5], key_channels, in_channels)
    fout = conv_bn(keys[6], 2 * in_channels, output_channels)
    return (fp1, fp2, fo1, fo2, fd, fu, fout)


# ------------------------------- references -----------------------------------


def ref_from_prepared(prep):
    """Numerics-matched reference: same padding/folding/bf16 rounding points."""
    f32, bf16 = jnp.float32, jnp.bfloat16
    xf, pf = prep["x"], prep["p"]
    wfp1, wfp2, wfo1, wfo2, wfd, wfu, wox, woc = prep["weights"]
    bias = prep["bias"]
    kc_pad, c_pad, cout_pad = prep["kc_pad"], prep["c_pad"], prep["cout_pad"]

    def lbr(z_bf, wm, b):
        y = jnp.einsum("bnc,ck->bnk", z_bf, wm, preferred_element_type=f32)
        return jnp.maximum(y + b[None, None, :], 0.0)

    q = lbr(lbr(xf, wfp1, bias[0, :kc_pad]).astype(bf16), wfp2, bias[1, :kc_pad])
    k = lbr(lbr(pf, wfo1, bias[2, :kc_pad]).astype(bf16), wfo2, bias[3, :kc_pad])
    v = lbr(pf, wfd, bias[4, :kc_pad])

    smi = jnp.einsum("bnk,bmk->bnm", q.astype(bf16), k.astype(bf16),
                     preferred_element_type=f32)
    col = jnp.arange(smi.shape[-1])[None, None, :]
    smi = jnp.where(col < prep["m"], smi, jnp.float32(-1e30))
    smi = smi - jnp.max(smi, axis=-1, keepdims=True)
    e = jnp.exp(smi)
    attn = e / jnp.sum(e, axis=-1, keepdims=True)

    ctx = jnp.einsum("bnm,bmk->bnk", attn.astype(bf16), v.astype(bf16),
                     preferred_element_type=f32)
    context = lbr(ctx.astype(bf16), wfu, bias[5, :c_pad])
    y = (jnp.einsum("bnc,ck->bnk", xf, wox, preferred_element_type=f32)
         + jnp.einsum("bnc,ck->bnk", context.astype(bf16), woc,
                      preferred_element_type=f32))
    out = jnp.maximum(y + bias[6, :cout_pad][None, None, :], 0.0)
    out = out[:, :prep["n"], :prep["cout"]]
    out = out.reshape(prep["bs"], prep["h"], prep["w"], prep["cout"])
    return jnp.transpose(out, (0, 3, 1, 2))


def ref_module_f32(feats, proxy, params):
    """Straight fp32 math of the PyTorch module (no padding/folding/bf16)."""
    fp1, fp2, fo1, fo2, fd, fu, fout = params
    kc = fp1[0].shape[1]
    cout = fout[0].shape[1]

    def cbr(z, layer):
        wm, s, b = layer
        return jnp.maximum((z @ wm) * s + b, 0.0)

    bs, c, h, w = feats.shape
    _, _, hp, wp = proxy.shape
    xf = jnp.transpose(feats, (0, 2, 3, 1)).reshape(bs, h * w, c)
    pf = jnp.transpose(proxy, (0, 2, 3, 1)).reshape(bs, hp * wp, c)

    q = cbr(cbr(xf, fp1), fp2)
    k = cbr(cbr(pf, fo1), fo2)
    v = cbr(pf, fd)
    smi = jnp.einsum("bnk,bmk->bnm", q, k) * (float(kc) ** -0.5)
    attn = jax.nn.softmax(smi, axis=-1)
    ctx = jnp.einsum("bnm,bmk->bnk", attn, v)
    context = cbr(ctx, fu)
    out = cbr(jnp.concatenate([xf, context], axis=-1), fout)
    return jnp.transpose(out.reshape(bs, h, w, cout), (0, 3, 1, 2))


# --------------------------------- main ----------------------------------------


if __name__ == "__main__":
    key = jax.random.PRNGKey(0)
    k_x, k_p, k_w = jax.random.split(key, 3)

    bs, in_channels, key_channels, out_channels = 2, 4, 32, 4
    h = w = 16          # pixel feature map
    hp, wp = 8, 1       # proxy (object regions), as in OCRNet

    x = jax.random.normal(k_x, (bs, in_channels, h, w), jnp.float32)
    proxy = jax.random.normal(k_p, (bs, in_channels, hp, wp), jnp.float32)
    params = init_params(k_w, in_channels, key_channels, out_channels)

    out = spatial_ocr_module(x, proxy, params, tn=128)
    out = jax.block_until_ready(out)
    assert out.shape == (bs, out_channels, h, w)

    # Tight check vs a reference with identical bf16 rounding / padding / folding.
    prep = _prepare(x, proxy, params, tn=128)
    ref_bf16 = ref_from_prepared(prep)
    assert jnp.allclose(out, ref_bf16, rtol=2e-2, atol=2e-2), \
        "mismatch vs bf16-matched reference"

    # Loose sanity check vs the straight fp32 module math (bf16 MXU operands).
    ref_f32 = ref_module_f32(x, proxy, params)
    assert jnp.allclose(out, ref_f32, rtol=1e-1, atol=3e-1), \
        "mismatch vs f32 module reference"

    print("KERNEL_OK")
</pallas_src>

<mosaic_0001>
module attributes {stable_mosaic.version = 11 : i64} {
  func.func @_spatial_ocr_kernel(%arg0: i32, %arg1: i32, %arg2: memref<1x128x128xbf16, #tpu.memory_space<vmem>>, %arg3: memref<1x128x128xbf16, #tpu.memory_space<vmem>>, %arg4: memref<128x128xbf16, #tpu.memory_space<vmem>>, %arg5: memref<128x128xbf16, #tpu.memory_space<vmem>>, %arg6: memref<128x128xbf16, #tpu.memory_space<vmem>>, %arg7: memref<128x128xbf16, #tpu.memory_space<vmem>>, %arg8: memref<128x128xbf16, #tpu.memory_space<vmem>>, %arg9: memref<128x128xbf16, #tpu.memory_space<vmem>>, %arg10: memref<128x128xbf16, #tpu.memory_space<vmem>>, %arg11: memref<128x128xbf16, #tpu.memory_space<vmem>>, %arg12: memref<8x128xf32, #tpu.memory_space<vmem>>, %arg13: memref<1x128x128xf32, #tpu.memory_space<vmem>>) attributes {dimension_semantics = [#tpu.dimension_semantics<parallel>, #tpu.dimension_semantics<parallel>], iteration_bounds = array<i64: 2, 2>, scalar_prefetch = 0 : i64, scratch_operands = 0 : i64, tpu.core_type = #tpu.core_type<tc>, window_params = [{transform_indices = @transform_0, window_bounds = array<i64: 1, 128, 128>}, {transform_indices = @transform_1, window_bounds = array<i64: 1, 128, 128>}, {pipeline_mode = #tpu.pipeline_mode<synchronous>, transform_indices = @transform_2, window_bounds = array<i64: 128, 128>}, {pipeline_mode = #tpu.pipeline_mode<synchronous>, transform_indices = @transform_3, window_bounds = array<i64: 128, 128>}, {pipeline_mode = #tpu.pipeline_mode<synchronous>, transform_indices = @transform_4, window_bounds = array<i64: 128, 128>}, {pipeline_mode = #tpu.pipeline_mode<synchronous>, transform_indices = @transform_5, window_bounds = array<i64: 128, 128>}, {pipeline_mode = #tpu.pipeline_mode<synchronous>, transform_indices = @transform_6, window_bounds = array<i64: 128, 128>}, {pipeline_mode = #tpu.pipeline_mode<synchronous>, transform_indices = @transform_7, window_bounds = array<i64: 128, 128>}, {pipeline_mode = #tpu.pipeline_mode<synchronous>, transform_indices = @transform_8, window_bounds = array<i64: 128, 128>}, {pipeline_mode = #tpu.pipeline_mode<synchronous>, transform_indices = @transform_9, window_bounds = array<i64: 128, 128>}, {pipeline_mode = #tpu.pipeline_mode<synchronous>, transform_indices = @transform_10, window_bounds = array<i64: 8, 128>}, {transform_indices = @transform_11, window_bounds = array<i64: 1, 128, 128>}]} {
    %c0 = arith.constant 0 : index
    %c0_0 = arith.constant 0 : index
    %c0_1 = arith.constant 0 : index
    %0 = vector.load %arg2[%c0, %c0_0, %c0_1] : memref<1x128x128xbf16, #tpu.memory_space<vmem>>, vector<1x128x128xbf16>
    %1 = vector.shape_cast %0 : vector<1x128x128xbf16> to vector<128x128xbf16>
    %c0_2 = arith.constant 0 : index
    %c0_3 = arith.constant 0 : index
    %c0_4 = arith.constant 0 : index
    %2 = vector.load %arg3[%c0_2, %c0_3, %c0_4] : memref<1x128x128xbf16, #tpu.memory_space<vmem>>, vector<1x128x128xbf16>
    %3 = vector.shape_cast %2 : vector<1x128x128xbf16> to vector<128x128xbf16>
    %c0_5 = arith.constant 0 : index
    %c0_6 = arith.constant 0 : index
    %4 = vector.load %arg12[%c0_5, %c0_6] : memref<8x128xf32, #tpu.memory_space<vmem>>, vector<8x128xf32>
    %5 = vector.extract_strided_slice %4 {offsets = [0, 0], sizes = [1, 128], strides = [1, 1]} : vector<8x128xf32> to vector<1x128xf32>
    %6 = vector.extract_strided_slice %4 {offsets = [1, 0], sizes = [1, 128], strides = [1, 1]} : vector<8x128xf32> to vector<1x128xf32>
    %7 = vector.extract_strided_slice %4 {offsets = [2, 0], sizes = [1, 128], strides = [1, 1]} : vector<8x128xf32> to vector<1x128xf32>
    %8 = vector.extract_strided_slice %4 {offsets = [3, 0], sizes = [1, 128], strides = [1, 1]} : vector<8x128xf32> to vector<1x128xf32>
    %9 = vector.extract_strided_slice %4 {offsets = [4, 0], sizes = [1, 128], strides = [1, 1]} : vector<8x128xf32> to vector<1x128xf32>
    %10 = vector.extract_strided_slice %4 {offsets = [5, 0], sizes = [1, 128], strides = [1, 1]} : vector<8x128xf32> to vector<1x128xf32>
    %11 = vector.extract_strided_slice %4 {offsets = [6, 0], sizes = [1, 128], strides = [1, 1]} : vector<8x128xf32> to vector<1x128xf32>
    %c0_7 = arith.constant 0 : index
    %c0_8 = arith.constant 0 : index
    %12 = vector.load %arg4[%c0_7, %c0_8] : memref<128x128xbf16, #tpu.memory_space<vmem>>, vector<128x128xbf16>
    %cst = arith.constant dense<0.000000e+00> : vector<128x128xf32>
    %13 = tpu.matmul %1, %12, %cst {dimension_numbers = #tpu.dot_dimension_numbers<[1], [0], [0], [1], [0, 0, 1, 1], [], []>} : vector<128x128xbf16>, vector<128x128xbf16>, vector<128x128xf32> -> vector<128x128xf32>
    %14 = vector.broadcast %5 : vector<1x128xf32> to vector<128x128xf32>
    %15 = arith.addf %13, %14 : vector<128x128xf32>
    %cst_9 = arith.constant 0.000000e+00 : f32
    %16 = vector.broadcast %cst_9 : f32 to vector<128x128xf32>
    %17 = arith.maximumf %15, %16 : vector<128x128xf32>
    %18 = arith.truncf %17 : vector<128x128xf32> to vector<128x128xbf16>
    %c0_10 = arith.constant 0 : index
    %c0_11 = arith.constant 0 : index
    %19 = vector.load %arg5[%c0_10, %c0_11] : memref<128x128xbf16, #tpu.memory_space<vmem>>, vector<128x128xbf16>
    %cst_12 = arith.constant dense<0.000000e+00> : vector<128x128xf32>
    %20 = tpu.matmul %18, %19, %cst_12 {dimension_numbers = #tpu.dot_dimension_numbers<[1], [0], [0], [1], [0, 0, 1, 1], [], []>} : vector<128x128xbf16>, vector<128x128xbf16>, vector<128x128xf32> -> vector<128x128xf32>
    %21 = vector.broadcast %6 : vector<1x128xf32> to vector<128x128xf32>
    %22 = arith.addf %20, %21 : vector<128x128xf32>
    %cst_13 = arith.constant 0.000000e+00 : f32
    %23 = vector.broadcast %cst_13 : f32 to vector<128x128xf32>
    %24 = arith.maximumf %22, %23 : vector<128x128xf32>
    %c0_14 = arith.constant 0 : index
    %c0_15 = arith.constant 0 : index
    %25 = vector.load %arg6[%c0_14, %c0_15] : memref<128x128xbf16, #tpu.memory_space<vmem>>, vector<128x128xbf16>
    %cst_16 = arith.constant dense<0.000000e+00> : vector<128x128xf32>
    %26 = tpu.matmul %3, %25, %cst_16 {dimension_numbers = #tpu.dot_dimension_numbers<[1], [0], [0], [1], [0, 0, 1, 1], [], []>} : vector<128x128xbf16>, vector<128x128xbf16>, vector<128x128xf32> -> vector<128x128xf32>
    %27 = vector.broadcast %7 : vector<1x128xf32> to vector<128x128xf32>
    %28 = arith.addf %26, %27 : vector<128x128xf32>
    %cst_17 = arith.constant 0.000000e+00 : f32
    %29 = vector.broadcast %cst_17 : f32 to vector<128x128xf32>
    %30 = arith.maximumf %28, %29 : vector<128x128xf32>
    %31 = arith.truncf %30 : vector<128x128xf32> to vector<128x128xbf16>
    %c0_18 = arith.constant 0 : index
    %c0_19 = arith.constant 0 : index
    %32 = vector.load %arg7[%c0_18, %c0_19] : memref<128x128xbf16, #tpu.memory_space<vmem>>, vector<128x128xbf16>
    %cst_20 = arith.constant dense<0.000000e+00> : vector<128x128xf32>
    %33 = tpu.matmul %31, %32, %cst_20 {dimension_numbers = #tpu.dot_dimension_numbers<[1], [0], [0], [1], [0, 0, 1, 1], [], []>} : vector<128x128xbf16>, vector<128x128xbf16>, vector<128x128xf32> -> vector<128x128xf32>
    %34 = vector.broadcast %8 : vector<1x128xf32> to vector<128x128xf32>
    %35 = arith.addf %33, %34 : vector<128x128xf32>
    %cst_21 = arith.constant 0.000000e+00 : f32
    %36 = vector.broadcast %cst_21 : f32 to vector<128x128xf32>
    %37 = arith.maximumf %35, %36 : vector<128x128xf32>
    %c0_22 = arith.constant 0 : index
    %c0_23 = arith.constant 0 : index
    %38 = vector.load %arg8[%c0_22, %c0_23] : memref<128x128xbf16, #tpu.memory_space<vmem>>, vector<128x128xbf16>
    %cst_24 = arith.constant dense<0.000000e+00> : vector<128x128xf32>
    %39 = tpu.matmul %3, %38, %cst_24 {dimension_numbers = #tpu.dot_dimension_numbers<[1], [0], [0], [1], [0, 0, 1, 1], [], []>} : vector<128x128xbf16>, vector<128x128xbf16>, vector<128x128xf32> -> vector<128x128xf32>
    %40 = vector.broadcast %9 : vector<1x128xf32> to vector<128x128xf32>
    %41 = arith.addf %39, %40 : vector<128x128xf32>
    %cst_25 = arith.constant 0.000000e+00 : f32
    %42 = vector.broadcast %cst_25 : f32 to vector<128x128xf32>
    %43 = arith.maximumf %41, %42 : vector<128x128xf32>
    %44 = arith.truncf %24 : vector<128x128xf32> to vector<128x128xbf16>
    %45 = arith.truncf %37 : vector<128x128xf32> to vector<128x128xbf16>
    %cst_26 = arith.constant dense<0.000000e+00> : vector<128x128xf32>
    %46 = tpu.matmul %44, %45, %cst_26 {dimension_numbers = #tpu.dot_dimension_numbers<[1], [1], [0], [0], [0, 0, 1, 0], [], []>} : vector<128x128xbf16>, vector<128x128xbf16>, vector<128x128xf32> -> vector<128x128xf32>
    %47 = tpu.iota {dimensions = array<i32: 1>} : vector<128x128xi32>
    %c8_i32 = arith.constant 8 : i32
    %48 = vector.broadcast %c8_i32 : i32 to vector<128x128xi32>
    %49 = arith.cmpi slt, %47, %48 : vector<128x128xi32>
    %cst_27 = arith.constant -1.000000e+30 : f32
    %50 = vector.broadcast %cst_27 : f32 to vector<128x128xf32>
    %51 = arith.select %49, %46, %50 : vector<128x128xi1>, vector<128x128xf32>
    %cst_28 = arith.constant dense<0xFF800000> : vector<128xf32>
    %52 = vector.multi_reduction <maximumf>, %51, %cst_28 [1] : vector<128x128xf32> to vector<128xf32>
    %53 = vector.shape_cast %52 : vector<128xf32> to vector<128x1xf32>
    %54 = vector.broadcast %53 : vector<128x1xf32> to vector<128x128xf32>
    %55 = arith.subf %51, %54 : vector<128x128xf32>
    %56 = math.exp %55 : vector<128x128xf32>
    %cst_29 = arith.constant dense<0.000000e+00> : vector<128xf32>
    %57 = vector.multi_reduction <add>, %56, %cst_29 [1] : vector<128x128xf32> to vector<128xf32>
    %58 = vector.shape_cast %57 : vector<128xf32> to vector<128x1xf32>
    %59 = tpu.reciprocal %58 {approx = true} : vector<128x1xf32> -> vector<128x1xf32>
    %60 = vector.broadcast %59 : vector<128x1xf32> to vector<128x128xf32>
    %61 = arith.mulf %56, %60 : vector<128x128xf32>
    %62 = arith.truncf %61 : vector<128x128xf32> to vector<128x128xbf16>
    %63 = arith.truncf %43 : vector<128x128xf32> to vector<128x128xbf16>
    %cst_30 = arith.constant dense<0.000000e+00> : vector<128x128xf32>
    %64 = tpu.matmul %62, %63, %cst_30 {dimension_numbers = #tpu.dot_dimension_numbers<[1], [0], [0], [1], [0, 0, 1, 1], [], []>} : vector<128x128xbf16>, vector<128x128xbf16>, vector<128x128xf32> -> vector<128x128xf32>
    %65 = arith.truncf %64 : vector<128x128xf32> to vector<128x128xbf16>
    %c0_31 = arith.constant 0 : index
    %c0_32 = arith.constant 0 : index
    %66 = vector.load %arg9[%c0_31, %c0_32] : memref<128x128xbf16, #tpu.memory_space<vmem>>, vector<128x128xbf16>
    %cst_33 = arith.constant dense<0.000000e+00> : vector<128x128xf32>
    %67 = tpu.matmul %65, %66, %cst_33 {dimension_numbers = #tpu.dot_dimension_numbers<[1], [0], [0], [1], [0, 0, 1, 1], [], []>} : vector<128x128xbf16>, vector<128x128xbf16>, vector<128x128xf32> -> vector<128x128xf32>
    %68 = vector.broadcast %10 : vector<1x128xf32> to vector<128x128xf32>
    %69 = arith.addf %67, %68 : vector<128x128xf32>
    %cst_34 = arith.constant 0.000000e+00 : f32
    %70 = vector.broadcast %cst_34 : f32 to vector<128x128xf32>
    %71 = arith.maximumf %69, %70 : vector<128x128xf32>
    %c0_35 = arith.constant 0 : index
    %c0_36 = arith.constant 0 : index
    %72 = vector.load %arg10[%c0_35, %c0_36] : memref<128x128xbf16, #tpu.memory_space<vmem>>, vector<128x128xbf16>
    %cst_37 = arith.constant dense<0.000000e+00> : vector<128x128xf32>
    %73 = tpu.matmul %1, %72, %cst_37 {dimension_numbers = #tpu.dot_dimension_numbers<[1], [0], [0], [1], [0, 0, 1, 1], [], []>} : vector<128x128xbf16>, vector<128x128xbf16>, vector<128x128xf32> -> vector<128x128xf32>
    %74 = arith.truncf %71 : vector<128x128xf32> to vector<128x128xbf16>
    %c0_38 = arith.constant 0 : index
    %c0_39 = arith.constant 0 : index
    %75 = vector.load %arg11[%c0_38, %c0_39] : memref<128x128xbf16, #tpu.memory_space<vmem>>, vector<128x128xbf16>
    %cst_40 = arith.constant dense<0.000000e+00> : vector<128x128xf32>
    %76 = tpu.matmul %74, %75, %cst_40 {dimension_numbers = #tpu.dot_dimension_numbers<[1], [0], [0], [1], [0, 0, 1, 1], [], []>} : vector<128x128xbf16>, vector<128x128xbf16>, vector<128x128xf32> -> vector<128x128xf32>
    %77 = arith.addf %73, %76 : vector<128x128xf32>
    %78 = vector.broadcast %11 : vector<1x128xf32> to vector<128x128xf32>
    %79 = arith.addf %77, %78 : vector<128x128xf32>
    %cst_41 = arith.constant 0.000000e+00 : f32
    %80 = vector.broadcast %cst_41 : f32 to vector<128x128xf32>
    %81 = arith.maximumf %79, %80 : vector<128x128xf32>
    %c0_42 = arith.constant 0 : index
    %c0_43 = arith.constant 0 : index
    %c0_44 = arith.constant 0 : index
    %82 = vector.load %arg13[%c0_42, %c0_43, %c0_44] : memref<1x128x128xf32, #tpu.memory_space<vmem>>, vector<1x128x128xf32>
    %83 = vector.shape_cast %82 : vector<1x128x128xf32> to vector<128x128xf32>
    %84 = vector.shape_cast %81 : vector<128x128xf32> to vector<1x128x128xf32>
    tpu.vector_store %arg13[%c0_42, %c0_43, %c0_44], %84 {strides = array<i32>} : memref<1x128x128xf32, #tpu.memory_space<vmem>>, vector<1x128x128xf32>,
    return
  }
  func.func @transform_0(%arg0: i32, %arg1: i32) -> (i32, i32, i32) {
    %c0_i32 = arith.constant 0 : i32
    %c0_i32_0 = arith.constant 0 : i32
    return %arg0, %arg1, %c0_i32 : i32, i32, i32
  }
  func.func @transform_1(%arg0: i32, %arg1: i32) -> (i32, i32, i32) {
    %c0_i32 = arith.constant 0 : i32
    %c0_i32_0 = arith.constant 0 : i32
    %c0_i32_1 = arith.constant 0 : i32
    return %arg0, %c0_i32, %c0_i32_0 : i32, i32, i32
  }
  func.func @transform_2(%arg0: i32, %arg1: i32) -> (i32, i32) {
    %c0_i32 = arith.constant 0 : i32
    %c0_i32_0 = arith.constant 0 : i32
    %c0_i32_1 = arith.constant 0 : i32
    return %c0_i32, %c0_i32_0 : i32, i32
  }
  func.func @transform_3(%arg0: i32, %arg1: i32) -> (i32, i32) {
    %c0_i32 = arith.constant 0 : i32
    %c0_i32_0 = arith.constant 0 : i32
    %c0_i32_1 = arith.constant 0 : i32
    return %c0_i32, %c0_i32_0 : i32, i32
  }
  func.func @transform_4(%arg0: i32, %arg1: i32) -> (i32, i32) {
    %c0_i32 = arith.constant 0 : i32
    %c0_i32_0 = arith.constant 0 : i32
    %c0_i32_1 = arith.constant 0 : i32
    return %c0_i32, %c0_i32_0 : i32, i32
  }
  func.func @transform_5(%arg0: i32, %arg1: i32) -> (i32, i32) {
    %c0_i32 = arith.constant 0 : i32
    %c0_i32_0 = arith.constant 0 : i32
    %c0_i32_1 = arith.constant 0 : i32
    return %c0_i32, %c0_i32_0 : i32, i32
  }
  func.func @transform_6(%arg0: i32, %arg1: i32) -> (i32, i32) {
    %c0_i32 = arith.constant 0 : i32
    %c0_i32_0 = arith.constant 0 : i32
    %c0_i32_1 = arith.constant 0 : i32
    return %c0_i32, %c0_i32_0 : i32, i32
  }
  func.func @transform_7(%arg0: i32, %arg1: i32) -> (i32, i32) {
    %c0_i32 = arith.constant 0 : i32
    %c0_i32_0 = arith.constant 0 : i32
    %c0_i32_1 = arith.constant 0 : i32
    return %c0_i32, %c0_i32_0 : i32, i32
  }
  func.func @transform_8(%arg0: i32, %arg1: i32) -> (i32, i32) {
    %c0_i32 = arith.constant 0 : i32
    %c0_i32_0 = arith.constant 0 : i32
    %c0_i32_1 = arith.constant 0 : i32
    return %c0_i32, %c0_i32_0 : i32, i32
  }
  func.func @transform_9(%arg0: i32, %arg1: i32) -> (i32, i32) {
    %c0_i32 = arith.constant 0 : i32
    %c0_i32_0 = arith.constant 0 : i32
    %c0_i32_1 = arith.constant 0 : i32
    return %c0_i32, %c0_i32_0 : i32, i32
  }
  func.func @transform_10(%arg0: i32, %arg1: i32) -> (i32, i32) {
    %c0_i32 = arith.constant 0 : i32
    %c0_i32_0 = arith.constant 0 : i32
    %c0_i32_1 = arith.constant 0 : i32
    return %c0_i32, %c0_i32_0 : i32, i32
  }
  func.func @transform_11(%arg0: i32, %arg1: i32) -> (i32, i32, i32) {
    %c0_i32 = arith.constant 0 : i32
    %c0_i32_0 = arith.constant 0 : i32
    return %arg0, %arg1, %c0_i32 : i32, i32, i32
  }
}

</mosaic_0001>

<llo_original>
// kernel: spatial_ocr_module.1
$region0: #{spatial_ocr_module.1}
  #allocation0 [shape = 'u32[]', space=smem, size = 0x4, offset = 0x4, fixed_abs, tag = 'smem constant byte address 0x4 - core index']
  #allocation1 [shape = 'u32[144,128]{1,0:T(1,128)}', space=vmem, size = 0x12000, scoped, tag = 'internal scratch']
  %s0 = inlined_call_operand.vmem [shape: bf16[2,256,128], index: 0, kind: input, shape index: {}]
  %s1 = inlined_call_operand.vmem [shape: bf16[2,128,128], index: 1, kind: input, shape index: {}]
  %s2 = inlined_call_operand.vmem [shape: bf16[128,128], index: 2, kind: input, shape index: {}]
  %s3 = inlined_call_operand.vmem [shape: bf16[128,128], index: 3, kind: input, shape index: {}]
  %s4 = inlined_call_operand.vmem [shape: bf16[128,128], index: 4, kind: input, shape index: {}]
  %s5 = inlined_call_operand.vmem [shape: bf16[128,128], index: 5, kind: input, shape index: {}]
  %s6 = inlined_call_operand.vmem [shape: bf16[128,128], index: 6, kind: input, shape index: {}]
  %s7 = inlined_call_operand.vmem [shape: bf16[128,128], index: 7, kind: input, shape index: {}]
  %s8 = inlined_call_operand.vmem [shape: bf16[128,128], index: 8, kind: input, shape index: {}]
  %s9 = inlined_call_operand.vmem [shape: bf16[128,128], index: 9, kind: input, shape index: {}]
  %s10 = inlined_call_operand.vmem [shape: f32[8,128], index: 10, kind: input, shape index: {}]
  %s11 = inlined_call_operand.vmem [shape: f32[2,256,128], index: 11, kind: output, shape index: {}]
  %s12 = sld [smem:[#allocation0]]
  $region77: #{spatial_ocr_module.1} parent=0
    _
  %s14 = ssub.s32 1, %s12
  %s15 = scalar_select 0, %s14, %s12
  loop: start=0, step=1, limit=6
  $region2: #{spatial_ocr_module.1} parent=0 // loop_pre_header
    _
  $region3: #{spatial_ocr_module.1} parent=0 // loop_header
    %s17 = sphi 0, %s21
    %p18 = scmp.ge.s32.totalorder %s17, 6
    %s24 = sphi 0, %s36
    %s25 = sphi 0, %s32
    %s26 = sphi 0, %s24
    %s27 = sphi 0, %s25
    %s28 = sphi 0, %s26
    %s29 = sphi 0, %s27
    %s41 = sphi 0, %s43
    %s44 = sphi 0, %s41
    %s45 = sphi 0, %s44
    %s61 = sphi 0, %s45
    %s67 = sphi 0, %s69
    %s70 = sphi 0, %s67
    %s71 = sphi 0, %s70
    %s87 = sphi 0, %s71
    %s91 = sphi 0, %s91
    %s93 = sphi 0, %s91
    %s94 = sphi 0, %s93
    %s108 = sphi 0, %s94
    %s112 = sphi 0, %s112
    %s114 = sphi 0, %s112
    %s115 = sphi 0, %s114
    %s129 = sphi 0, %s115
    %s133 = sphi 0, %s133
    %s135 = sphi 0, %s133
    %s136 = sphi 0, %s135
    %s150 = sphi 0, %s136
    %s154 = sphi 0, %s154
    %s156 = sphi 0, %s154
    %s157 = sphi 0, %s156
    %s171 = sphi 0, %s157
    %s175 = sphi 0, %s175
    %s177 = sphi 0, %s175
    %s178 = sphi 0, %s177
    %s192 = sphi 0, %s178
    %s196 = sphi 0, %s196
    %s198 = sphi 0, %s196
    %s199 = sphi 0, %s198
    %s213 = sphi 0, %s199
    %s217 = sphi 0, %s217
    %s219 = sphi 0, %s217
    %s220 = sphi 0, %s219
    %s234 = sphi 0, %s220
    %s238 = sphi 0, %s238
    %s240 = sphi 0, %s238
    %s241 = sphi 0, %s240
    %s255 = sphi 0, %s241
    %s259 = sphi 0, %s259
    %s261 = sphi 0, %s259
    %s262 = sphi 0, %s261
    %s276 = sphi 0, %s262
    %s284 = sphi 0, %s286
    %s287 = sphi 0, %s284
    %s288 = sphi 0, %s287
    %s304 = sphi 0, %s288
  $region4: #{spatial_ocr_module.1} parent=0 // loop_header_branch
    %20 = sbr.rel (%p18) target = $region8
  $region5: #{spatial_ocr_module.1} parent=0 // loop_body
    %s22 = ssub.s32 %s17, 1
    %s23 = ssub.s32 %s17, 2
    %s30 = sadd.s32 1, %s25
    %p31 = scmp.ge.s32.totalorder %s30, 2
    %s32 = scalar_select %p31, 0, %s30
    %s33 = sadd.s32 1, %s24
    %s34 = scalar_select %p31, %s33, %s24
    %p35 = scmp.ge.s32.totalorder %s34, 2
    %s36 = scalar_select %p35, 0, %s34
    %s37 = ssub.s32 %s24, %s36
    %s38 = ssub.s32 %s25, %s32
    %s39 = sor.u32 %s37, %s38
    %p40 = scmp.eq.s32.totalorder %s39, 0
    %s42 = sadd.s32 %s41, 1
    %s43 = scalar_select %p40, %s41, %s42
    %p46 = pneg %p40
    %p47 = scmp.eq.s32.totalorder %s17, 3
    %p48 = por %p46, %p47
    %p49 = scmp.ne.s32.totalorder %s41, %s44
    %p50 = scmp.eq.s32.totalorder %s17, 0
    %p51 = por %p49, %p50
    %p52 = scmp.ne.s32.totalorder %s41, %s44
    %p53 = scmp.eq.s32.totalorder %s22, 3
    %p54 = por %p52, %p53
    %p55 = scmp.ne.s32.totalorder %s44, %s45
    %p56 = scmp.eq.s32.totalorder %s22, 0
    %p57 = por %p55, %p56
    %p58 = scmp.ne.s32.totalorder %s44, %s45
    %p59 = scmp.eq.s32.totalorder %s23, 3
    %p60 = por %p58, %p59
    %p62 = scmp.ne.s32.totalorder %s45, %s61
    %p63 = scmp.eq.s32.totalorder %s23, 0
    %p64 = por %p62, %p63
    %s65 = ssub.s32 %s24, %s36
    %p66 = scmp.eq.s32.totalorder %s65, 0
    %s68 = sadd.s32 %s67, 1
    %s69 = scalar_select %p66, %s67, %s68
    %p72 = pneg %p66
    %p73 = scmp.eq.s32.totalorder %s17, 3
    %p74 = por %p72, %p73
    %p75 = scmp.ne.s32.totalorder %s67, %s70
    %p76 = scmp.eq.s32.totalorder %s17, 0
    %p77 = por %p75, %p76
    %p78 = scmp.ne.s32.totalorder %s67, %s70
    %p79 = scmp.eq.s32.totalorder %s22, 3
    %p80 = por %p78, %p79
    %p81 = scmp.ne.s32.totalorder %s70, %s71
    %p82 = scmp.eq.s32.totalorder %s22, 0
    %p83 = por %p81, %p82
    %p84 = scmp.ne.s32.totalorder %s70, %s71
    %p85 = scmp.eq.s32.totalorder %s23, 3
    %p86 = por %p84, %p85
    %p88 = scmp.ne.s32.totalorder %s71, %s87
    %p89 = scmp.eq.s32.totalorder %s23, 0
    %p90 = por %p88, %p89
    %s92 = sadd.s32 %s91, 1
    %p95 = scmp.eq.s32.totalorder %s17, 3
    %p96 = scmp.ne.s32.totalorder %s91, %s93
    %p97 = scmp.eq.s32.totalorder %s17, 0
    %p98 = por %p96, %p97
    %p99 = scmp.ne.s32.totalorder %s91, %s93
    %p100 = scmp.eq.s32.totalorder %s22, 3
    %p101 = por %p99, %p100
    %p102 = scmp.ne.s32.totalorder %s93, %s94
    %p103 = scmp.eq.s32.totalorder %s22, 0
    %p104 = por %p102, %p103
    %p105 = scmp.ne.s32.totalorder %s93, %s94
    %p106 = scmp.eq.s32.totalorder %s23, 3
    %p107 = por %p105, %p106
    %p109 = scmp.ne.s32.totalorder %s94, %s108
    %p110 = scmp.eq.s32.totalorder %s23, 0
    %p111 = por %p109, %p110
    %s113 = sadd.s32 %s112, 1
    %p116 = scmp.eq.s32.totalorder %s17, 3
    %p117 = scmp.ne.s32.totalorder %s112, %s114
    %p118 = scmp.eq.s32.totalorder %s17, 0
    %p119 = por %p117, %p118
    %p120 = scmp.ne.s32.totalorder %s112, %s114
    %p121 = scmp.eq.s32.totalorder %s22, 3
    %p122 = por %p120, %p121
    %p123 = scmp.ne.s32.totalorder %s114, %s115
    %p124 = scmp.eq.s32.totalorder %s22, 0
    %p125 = por %p123, %p124
    %p126 = scmp.ne.s32.totalorder %s114, %s115
    %p127 = scmp.eq.s32.totalorder %s23, 3
    %p128 = por %p126, %p127
    %p130 = scmp.ne.s32.totalorder %s115, %s129
    %p131 = scmp.eq.s32.totalorder %s23, 0
    %p132 = por %p130, %p131
    %s134 = sadd.s32 %s133, 1
    %p137 = scmp.eq.s32.totalorder %s17, 3
    %p138 = scmp.ne.s32.totalorder %s133, %s135
    %p139 = scmp.eq.s32.totalorder %s17, 0
    %p140 = por %p138, %p139
    %p141 = scmp.ne.s32.totalorder %s133, %s135
    %p142 = scmp.eq.s32.totalorder %s22, 3
    %p143 = por %p141, %p142
    %p144 = scmp.ne.s32.totalorder %s135, %s136
    %p145 = scmp.eq.s32.totalorder %s22, 0
    %p146 = por %p144, %p145
    %p147 = scmp.ne.s32.totalorder %s135, %s136
    %p148 = scmp.eq.s32.totalorder %s23, 3
    %p149 = por %p147, %p148
    %p151 = scmp.ne.s32.totalorder %s136, %s150
    %p152 = scmp.eq.s32.totalorder %s23, 0
    %p153 = por %p151, %p152
    %s155 = sadd.s32 %s154, 1
    %p158 = scmp.eq.s32.totalorder %s17, 3
    %p159 = scmp.ne.s32.totalorder %s154, %s156
    %p160 = scmp.eq.s32.totalorder %s17, 0
    %p161 = por %p159, %p160
    %p162 = scmp.ne.s32.totalorder %s154, %s156
    %p163 = scmp.eq.s32.totalorder %s22, 3
    %p164 = por %p162, %p163
    %p165 = scmp.ne.s32.totalorder %s156, %s157
    %p166 = scmp.eq.s32.totalorder %s22, 0
    %p167 = por %p165, %p166
    %p168 = scmp.ne.s32.totalorder %s156, %s157
    %p169 = scmp.eq.s32.totalorder %s23, 3
    %p170 = por %p168, %p169
    %p172 = scmp.ne.s32.totalorder %s157, %s171
    %p173 = scmp.eq.s32.totalorder %s23, 0
    %p174 = por %p172, %p173
    %s176 = sadd.s32 %s175, 1
    %p179 = scmp.eq.s32.totalorder %s17, 3
    %p180 = scmp.ne.s32.totalorder %s175, %s177
    %p181 = scmp.eq.s32.totalorder %s17, 0
    %p182 = por %p180, %p181
    %p183 = scmp.ne.s32.totalorder %s175, %s177
    %p184 = scmp.eq.s32.totalorder %s22, 3
    %p185 = por %p183, %p184
    %p186 = scmp.ne.s32.totalorder %s177, %s178
    %p187 = scmp.eq.s32.totalorder %s22, 0
    %p188 = por %p186, %p187
    %p189 = scmp.ne.s32.totalorder %s177, %s178
    %p190 = scmp.eq.s32.totalorder %s23, 3
    %p191 = por %p189, %p190
    %p193 = scmp.ne.s32.totalorder %s178, %s192
    %p194 = scmp.eq.s32.totalorder %s23, 0
    %p195 = por %p193, %p194
    %s197 = sadd.s32 %s196, 1
    %p200 = scmp.eq.s32.totalorder %s17, 3
    %p201 = scmp.ne.s32.totalorder %s196, %s198
    %p202 = scmp.eq.s32.totalorder %s17, 0
    %p203 = por %p201, %p202
    %p204 = scmp.ne.s32.totalorder %s196, %s198
    %p205 = scmp.eq.s32.totalorder %s22, 3
    %p206 = por %p204, %p205
    %p207 = scmp.ne.s32.totalorder %s198, %s199
    %p208 = scmp.eq.s32.totalorder %s22, 0
    %p209 = por %p207, %p208
    %p210 = scmp.ne.s32.totalorder %s198, %s199
    %p211 = scmp.eq.s32.totalorder %s23, 3
    %p212 = por %p210, %p211
    %p214 = scmp.ne.s32.totalorder %s199, %s213
    %p215 = scmp.eq.s32.totalorder %s23, 0
    %p216 = por %p214, %p215
    %s218 = sadd.s32 %s217, 1
    %p221 = scmp.eq.s32.totalorder %s17, 3
    %p222 = scmp.ne.s32.totalorder %s217, %s219
    %p223 = scmp.eq.s32.totalorder %s17, 0
    %p224 = por %p222, %p223
    %p225 = scmp.ne.s32.totalorder %s217, %s219
    %p226 = scmp.eq.s32.totalorder %s22, 3
    %p227 = por %p225, %p226
    %p228 = scmp.ne.s32.totalorder %s219, %s220
    %p229 = scmp.eq.s32.totalorder %s22, 0
    %p230 = por %p228, %p229
    %p231 = scmp.ne.s32.totalorder %s219, %s220
    %p232 = scmp.eq.s32.totalorder %s23, 3
    %p233 = por %p231, %p232
    %p235 = scmp.ne.s32.totalorder %s220, %s234
    %p236 = scmp.eq.s32.totalorder %s23, 0
    %p237 = por %p235, %p236
    %s239 = sadd.s32 %s238, 1
    %p242 = scmp.eq.s32.totalorder %s17, 3
    %p243 = scmp.ne.s32.totalorder %s238, %s240
    %p244 = scmp.eq.s32.totalorder %s17, 0
    %p245 = por %p243, %p244
    %p246 = scmp.ne.s32.totalorder %s238, %s240
    %p247 = scmp.eq.s32.totalorder %s22, 3
    %p248 = por %p246, %p247
    %p249 = scmp.ne.s32.totalorder %s240, %s241
    %p250 = scmp.eq.s32.totalorder %s22, 0
    %p251 = por %p249, %p250
    %p252 = scmp.ne.s32.totalorder %s240, %s241
    %p253 = scmp.eq.s32.totalorder %s23, 3
    %p254 = por %p252, %p253
    %p256 = scmp.ne.s32.totalorder %s241, %s255
    %p257 = scmp.eq.s32.totalorder %s23, 0
    %p258 = por %p256, %p257
    %s260 = sadd.s32 %s259, 1
    %p263 = scmp.eq.s32.totalorder %s17, 3
    %p264 = scmp.ne.s32.totalorder %s259, %s261
    %p265 = scmp.eq.s32.totalorder %s17, 0
    %p266 = por %p264, %p265
    %p267 = scmp.ne.s32.totalorder %s259, %s261
    %p268 = scmp.eq.s32.totalorder %s22, 3
    %p269 = por %p267, %p268
    %p270 = scmp.ne.s32.totalorder %s261, %s262
    %p271 = scmp.eq.s32.totalorder %s22, 0
    %p272 = por %p270, %p271
    %p273 = scmp.ne.s32.totalorder %s261, %s262
    %p274 = scmp.eq.s32.totalorder %s23, 3
    %p275 = por %p273, %p274
    %p277 = scmp.ne.s32.totalorder %s262, %s276
    %p278 = scmp.eq.s32.totalorder %s23, 0
    %p279 = por %p277, %p278
    %s280 = ssub.s32 %s24, %s36
    %s281 = ssub.s32 %s25, %s32
    %s282 = sor.u32 %s280, %s281
    %p283 = scmp.eq.s32.totalorder %s282, 0
    %s285 = sadd.s32 %s284, 1
    %s286 = scalar_select %p283, %s284, %s285
    %p289 = pneg %p283
    %p290 = scmp.eq.s32.totalorder %s17, 3
    %p291 = por %p289, %p290
    %p292 = scmp.ne.s32.totalorder %s284, %s287
    %p293 = scmp.eq.s32.totalorder %s17, 0
    %p294 = por %p292, %p293
    %p295 = scmp.ne.s32.totalorder %s284, %s287
    %p296 = scmp.eq.s32.totalorder %s22, 3
    %p297 = por %p295, %p296
    %p298 = scmp.ne.s32.totalorder %s287, %s288
    %p299 = scmp.eq.s32.totalorder %s22, 0
    %p300 = por %p298, %p299
    %p301 = scmp.ne.s32.totalorder %s287, %s288
    %p302 = scmp.eq.s32.totalorder %s23, 3
    %p303 = por %p301, %p302
    %p305 = scmp.ne.s32.totalorder %s288, %s304
    %p306 = scmp.eq.s32.totalorder %s23, 0
    %p307 = por %p305, %p306
    %p308 = scmp.le.s32.totalorder 1, %s17
    %p309 = scmp.lt.s32.totalorder %s17, 5
    %p310 = pnand %p308, %p309
    %p311 = pneg %p310
    // Predicated region
    $region9: #{spatial_ocr_module.1} parent=5 // pred_check
      _
    $region10: #{spatial_ocr_module.1} parent=5 // pred_check_branch
      %313 = sbr.rel (%p310) target = $region12
    $region11: #{spatial_ocr_module.1} parent=5 // pred_region
      %s314 = ssub.s32 %s17, 1
      // Predicated region
      $region13: #{spatial_ocr_module.1} parent=11 // pred_check
        %p315 = pneg %p104
      $region14: #{spatial_ocr_module.1} parent=11 // pred_check_branch
        %317 = sbr.rel (%p315) target = $region16
      $region15: #{spatial_ocr_module.1} parent=11 // pred_region
        _
      $region16: #{spatial_ocr_module.1} parent=11 // pred_fallthru
        _
      // Predicated region
      $region17: #{spatial_ocr_module.1} parent=11 // pred_check
        %p318 = pneg %p125
      $region18: #{spatial_ocr_module.1} parent=11 // pred_check_branch
        %320 = sbr.rel (%p318) target = $region20
      $region19: #{spatial_ocr_module.1} parent=11 // pred_region
        _
      $region20: #{spatial_ocr_module.1} parent=11 // pred_fallthru
        _
      // Predicated region
      $region21: #{spatial_ocr_module.1} parent=11 // pred_check
        %p321 = pneg %p146
      $region22: #{spatial_ocr_module.1} parent=11 // pred_check_branch
        %323 = sbr.rel (%p321) target = $region24
      $region23: #{spatial_ocr_module.1} parent=11 // pred_region
        _
      $region24: #{spatial_ocr_module.1} parent=11 // pred_fallthru
        _
      // Predicated region
      $region25: #{spatial_ocr_module.1} parent=11 // pred_check
        %p324 = pneg %p167
      $region26: #{spatial_ocr_module.1} parent=11 // pred_check_branch
        %326 = sbr.rel (%p324) target = $region28
      $region27: #{spatial_ocr_module.1} parent=11 // pred_region
        _
      $region28: #{spatial_ocr_module.1} parent=11 // pred_fallthru
        _
      // Predicated region
      $region29: #{spatial_ocr_module.1} parent=11 // pred_check
        %p327 = pneg %p188
      $region30: #{spatial_ocr_module.1} parent=11 // pred_check_branch
        %329 = sbr.rel (%p327) target = $region32
      $region31: #{spatial_ocr_module.1} parent=11 // pred_region
        _
      $region32: #{spatial_ocr_module.1} parent=11 // pred_fallthru
        _
      // Predicated region
      $region33: #{spatial_ocr_module.1} parent=11 // pred_check
        %p330 = pneg %p209
      $region34: #{spatial_ocr_module.1} parent=11 // pred_check_branch
        %332 = sbr.rel (%p330) target = $region36
      $region35: #{spatial_ocr_module.1} parent=11 // pred_region
        _
      $region36: #{spatial_ocr_module.1} parent=11 // pred_fallthru
        _
      // Predicated region
      $region37: #{spatial_ocr_module.1} parent=11 // pred_check
        %p333 = pneg %p230
      $region38: #{spatial_ocr_module.1} parent=11 // pred_check_branch
        %335 = sbr.rel (%p333) target = $region40
      $region39: #{spatial_ocr_module.1} parent=11 // pred_region
        _
      $region40: #{spatial_ocr_module.1} parent=11 // pred_fallthru
        _
      // Predicated region
      $region41: #{spatial_ocr_module.1} parent=11 // pred_check
        %p336 = pneg %p251
      $region42: #{spatial_ocr_module.1} parent=11 // pred_check_branch
        %338 = sbr.rel (%p336) target = $region44
      $region43: #{spatial_ocr_module.1} parent=11 // pred_region
        _
      $region44: #{spatial_ocr_module.1} parent=11 // pred_fallthru
        _
      // Predicated region
      $region45: #{spatial_ocr_module.1} parent=11 // pred_check
        %p339 = pneg %p272
      $region46: #{spatial_ocr_module.1} parent=11 // pred_check_branch
        %341 = sbr.rel (%p339) target = $region48
      $region47: #{spatial_ocr_module.1} parent=11 // pred_region
        _
      $region48: #{spatial_ocr_module.1} parent=11 // pred_fallthru
        _
    $region12: #{spatial_ocr_module.1} parent=5 // pred_fallthru
      _
    %p342 = scmp.lt.s32.totalorder %s17, 4
    // Predicated region
    $region49: #{spatial_ocr_module.1} parent=5 // pred_check
      %p343 = pneg %p342
    $region50: #{spatial_ocr_module.1} parent=5 // pred_check_branch
      %345 = sbr.rel (%p343) target = $region52
    $region51: #{spatial_ocr_module.1} parent=5 // pred_region
      // Predicated region
      $region53: #{spatial_ocr_module.1} parent=51 // pred_check
        %p346 = pneg %p51
      $region54: #{spatial_ocr_module.1} parent=51 // pred_check_branch
        %348 = sbr.rel (%p346) target = $region56
      $region55: #{spatial_ocr_module.1} parent=51 // pred_region
        %s349 = smul.u32 16, %s25
        %p350 = scmp.lt.s32.totalorder %s24, 1
        %s351 = scalar_select %p350, %s24, 1
        %p352 = scmp.lt.s32.totalorder %s349, 31
        %s353 = scalar_select %p352, %s349, 31
        %s354 = smul.addr %s351, 32
        %s355 = sadd.s32 %s353, %s354
        %s356 = smul.addr %s355, 4
        %s357 = scalar_lea.vmem %s0, %s356
        %s358 = smul.u32 16, %s25
      $region56: #{spatial_ocr_module.1} parent=51 // pred_fallthru
        _
      // Predicated region
      $region57: #{spatial_ocr_module.1} parent=51 // pred_check
        %p359 = pneg %p77
      $region58: #{spatial_ocr_module.1} parent=51 // pred_check_branch
        %361 = sbr.rel (%p359) target = $region60
      $region59: #{spatial_ocr_module.1} parent=51 // pred_region
        %p362 = scmp.lt.s32.totalorder %s24, 1
        %s363 = scalar_select %p362, %s24, 1
        %s364 = smul.addr %s363, 16
        %s365 = smul.addr %s364, 4
        %s366 = scalar_lea.vmem %s1, %s365
      $region60: #{spatial_ocr_module.1} parent=51 // pred_fallthru
        _
    $region52: #{spatial_ocr_module.1} parent=5 // pred_fallthru
      _
    %p367 = scmp.le.s32.totalorder 1, %s17
    %p368 = scmp.lt.s32.totalorder %s17, 5
    %p369 = pnand %p367, %p368
    %p370 = pneg %p369
    // Predicated region
    $region61: #{spatial_ocr_module.1} parent=5 // pred_check
      _
    $region62: #{spatial_ocr_module.1} parent=5 // pred_check_branch
      %372 = sbr.rel (%p369) target = $region64
    $region63: #{spatial_ocr_module.1} parent=5 // pred_region
      %s373 = ssub.s32 %s17, 1
      %s374 = smul.u32 16, %s27
      %p375 = scmp.lt.s32.totalorder %s26, 1
      %s376 = scalar_select %p375, %s26, 1
      %p377 = scmp.lt.s32.totalorder %s374, 31
      %s378 = scalar_select %p377, %s374, 31
      %s379 = smul.addr %s376, 32
      %s380 = sadd.s32 %s378, %s379
      %s381 = smul.addr %s380, 4
      %s382 = scalar_lea.vmem %s0, %s381
      %p383 = pneg %p57
      %p384 = pneg %p54
      %p385 = scmp.lt.s32.totalorder %s26, 1
      %s386 = scalar_select %p385, %s26, 1
      %s387 = smul.addr %s386, 16
      %s388 = smul.addr %s387, 4
      %s389 = scalar_lea.vmem %s1, %s388
      %p390 = pneg %p83
      %p391 = pneg %p80
      %p392 = pneg %p104
      %p393 = pneg %p101
      %p394 = pneg %p125
      %p395 = pneg %p122
      %p396 = pneg %p146
      %p397 = pneg %p143
      %p398 = pneg %p167
      %p399 = pneg %p164
      %p400 = pneg %p188
      %p401 = pneg %p185
      %p402 = pneg %p209
      %p403 = pneg %p206
      %p404 = pneg %p230
      %p405 = pneg %p227
      %p406 = pneg %p251
      %p407 = pneg %p248
      %p408 = pneg %p272
      %p409 = pneg %p269
      %p410 = pneg %p300
      %p411 = pneg %p297
      %s412 = smul.u32 16, %s27
      %p413 = scmp.lt.s32.totalorder %s26, 1
      %s414 = scalar_select %p413, %s26, 1
      %p415 = scmp.lt.s32.totalorder %s412, 31
      %s416 = scalar_select %p415, %s412, 31
      %s417 = smul.addr %s414, 32
      %s418 = sadd.s32 %s416, %s417
      %s419 = smul.addr %s418, 8
      %s420 = scalar_lea.vmem %s11, %s419
      %s421 = smul.u32 16, %s27
      %p422 = scmp.lt.s32.totalorder %s26, 1
      %s423 = scalar_select %p422, %s26, 1
      %p424 = scmp.lt.s32.totalorder %s421, 31
      %s425 = scalar_select %p424, %s421, 31
      %s426 = smul.addr %s423, 32
      %s427 = sadd.s32 %s425, %s426
      %s428 = smul.addr %s427, 4
      %s429 = scalar_lea.vmem %s0, %s428
      %s430 = smul.u32 16, %s27
      %p431 = scmp.lt.s32.totalorder %s26, 1
      %s432 = scalar_select %p431, %s26, 1
      %s433 = smul.addr %s432, 16
      %s434 = smul.addr %s433, 4
      %s435 = scalar_lea.vmem %s1, %s434
      %s436 = smul.u32 16, %s27
      %p437 = scmp.lt.s32.totalorder %s26, 1
      %s438 = scalar_select %p437, %s26, 1
      %p439 = scmp.lt.s32.totalorder %s436, 31
      %s440 = scalar_select %p439, %s436, 31
      %s441 = smul.addr %s438, 32
      %s442 = sadd.s32 %s440, %s441
      %s443 = smul.addr %s442, 8
      %s444 = scalar_lea.vmem %s11, %s443
      %s445 = smul.u32 16, %s27
      %v447 = vld [vmem:[%s429] sm:$0xf]
      %v448 = vld [vmem:[%s429 + $0x4] sm:$0xf]
      %v449 = vld [vmem:[%s429 + $0x8] sm:$0xf]
      %v450 = vld [vmem:[%s429 + $0xc] sm:$0xf]
      %v451 = vld [vmem:[%s429 + $0x10] sm:$0xf]
      %v452 = vld [vmem:[%s429 + $0x14] sm:$0xf]
      %v453 = vld [vmem:[%s429 + $0x18] sm:$0xf]
      %v454 = vld [vmem:[%s429 + $0x1c] sm:$0xf]
      %v455 = vld [vmem:[%s429 + $0x20] sm:$0xf]
      %v456 = vld [vmem:[%s429 + $0x24] sm:$0xf]
      %v457 = vld [vmem:[%s429 + $0x28] sm:$0xf]
      %v458 = vld [vmem:[%s429 + $0x2c] sm:$0xf]
      %v459 = vld [vmem:[%s429 + $0x30] sm:$0xf]
      %v460 = vld [vmem:[%s429 + $0x34] sm:$0xf]
      %v461 = vld [vmem:[%s429 + $0x38] sm:$0xf]
      %v462 = vld [vmem:[%s429 + $0x3c] sm:$0xf]
      %v463 = vld [vmem:[%s435] sm:$0xf]
      %v464 = vld [vmem:[%s435 + $0x4] sm:$0xf]
      %v465 = vld [vmem:[%s435 + $0x8] sm:$0xf]
      %v466 = vld [vmem:[%s435 + $0xc] sm:$0xf]
      %v467 = vld [vmem:[%s435 + $0x10] sm:$0xf]
      %v468 = vld [vmem:[%s435 + $0x14] sm:$0xf]
      %v469 = vld [vmem:[%s435 + $0x18] sm:$0xf]
      %v470 = vld [vmem:[%s435 + $0x1c] sm:$0xf]
      %v471 = vld [vmem:[%s435 + $0x20] sm:$0xf]
      %v472 = vld [vmem:[%s435 + $0x24] sm:$0xf]
      %v473 = vld [vmem:[%s435 + $0x28] sm:$0xf]
      %v474 = vld [vmem:[%s435 + $0x2c] sm:$0xf]
      %v475 = vld [vmem:[%s435 + $0x30] sm:$0xf]
      %v476 = vld [vmem:[%s435 + $0x34] sm:$0xf]
      %v477 = vld [vmem:[%s435 + $0x38] sm:$0xf]
      %v478 = vld [vmem:[%s435 + $0x3c] sm:$0xf]
      %v479 = vld [vmem:[%s10] sm:$0xff]
      %v480 = vld [vmem:[%s2] sm:$0xf]
      %v481 = vld [vmem:[%s2 + $0x4] sm:$0xf]
      %v482 = vld [vmem:[%s2 + $0x8] sm:$0xf]
      %v483 = vld [vmem:[%s2 + $0xc] sm:$0xf]
      %v484 = vld [vmem:[%s2 + $0x10] sm:$0xf]
      %v485 = vld [vmem:[%s2 + $0x14] sm:$0xf]
      %v486 = vld [vmem:[%s2 + $0x18] sm:$0xf]
      %v487 = vld [vmem:[%s2 + $0x1c] sm:$0xf]
      %v488 = vld [vmem:[%s2 + $0x20] sm:$0xf]
      %v489 = vld [vmem:[%s2 + $0x24] sm:$0xf]
      %v490 = vld [vmem:[%s2 + $0x28] sm:$0xf]
      %v491 = vld [vmem:[%s2 + $0x2c] sm:$0xf]
      %v492 = vld [vmem:[%s2 + $0x30] sm:$0xf]
      %v493 = vld [vmem:[%s2 + $0x34] sm:$0xf]
      %v494 = vld [vmem:[%s2 + $0x38] sm:$0xf]
      %v495 = vld [vmem:[%s2 + $0x3c] sm:$0xf]
      %v496 = vlaneseq
      %v497 = vshrl.u32 %v496, 7
      %v498 = vsub.s32 0, %v497
      %v499 = vrot.slane %v479, %v498
      %v516 = vunpack.c.l.b16 %v447
      %v517 = vunpack.c.l.b16 %v448
      %v518 = vunpack.c.l.b16 %v449
      %v519 = vunpack.c.l.b16 %v450
      %v520 = vunpack.c.l.b16 %v451
      %v521 = vunpack.c.l.b16 %v452
      %v522 = vunpack.c.l.b16 %v453
      %v523 = vunpack.c.l.b16 %v454
      %v524 = vunpack.c.l.b16 %v455
      %v525 = vunpack.c.l.b16 %v456
      %v526 = vunpack.c.l.b16 %v457
      %v527 = vunpack.c.l.b16 %v458
      %v528 = vunpack.c.l.b16 %v459
      %v529 = vunpack.c.l.b16 %v460
      %v530 = vunpack.c.l.b16 %v461
      %v531 = vunpack.c.l.b16 %v462
      %v532 = vpack.c.b16 %v517, %v516
      %v533 = vpack.c.b16 %v519, %v518
      %v534 = vpack.c.b16 %v521, %v520
      %v535 = vpack.c.b16 %v523, %v522
      %v536 = vpack.c.b16 %v525, %v524
      %v537 = vpack.c.b16 %v527, %v526
      %v538 = vpack.c.b16 %v529, %v528
      %v539 = vpack.c.b16 %v531, %v530
      %v564 = vunpack.c.l.b16 %v480
      %v565 = vunpack.c.l.b16 %v481
      %v566 = vunpack.c.l.b16 %v482
      %v567 = vunpack.c.l.b16 %v483
      %v568 = vunpack.c.l.b16 %v484
      %v569 = vunpack.c.l.b16 %v485
      %v570 = vunpack.c.l.b16 %v486
      %v571 = vunpack.c.l.b16 %v487
      %v572 = vunpack.c.l.b16 %v488
      %v573 = vunpack.c.l.b16 %v489
      %v574 = vunpack.c.l.b16 %v490
      %v575 = vunpack.c.l.b16 %v491
      %v576 = vunpack.c.l.b16 %v492
      %v577 = vunpack.c.l.b16 %v493
      %v578 = vunpack.c.l.b16 %v494
      %v579 = vunpack.c.l.b16 %v495
      %v580 = vpack.c.b16 %v565, %v564
      %v581 = vpack.c.b16 %v567, %v566
      %v582 = vpack.c.b16 %v569, %v568
      %v583 = vpack.c.b16 %v571, %v570
      %v584 = vpack.c.b16 %v573, %v572
      %v585 = vpack.c.b16 %v575, %v574
      %v586 = vpack.c.b16 %v577, %v576
      %v587 = vpack.c.b16 %v579, %v578
      %596 = vmatprep.subr.bf16.mxu0 0
      %597 = vmatpush1.bf16.msra.mxu0 %v587
      %598 = vmatprep.subr.bf16.mxu0 0
      %599 = vmatpush1.bf16.msra.mxu0 %v586
      %600 = vmatprep.subr.bf16.mxu0 0
      %601 = vmatpush1.bf16.msra.mxu0 %v585
      %602 = vmatprep.subr.bf16.mxu0 0
      %603 = vmatpush1.bf16.msra.mxu0 %v584
      %604 = vmatprep.subr.bf16.mxu0 0
      %605 = vmatpush1.bf16.msra.mxu0 %v583
      %606 = vmatprep.subr.bf16.mxu0 0
      %607 = vmatpush1.bf16.msra.mxu0 %v582
      %608 = vmatprep.subr.bf16.mxu0 0
      %609 = vmatpush1.bf16.msra.mxu0 %v581
      %610 = vmatprep.subr.bf16.mxu0 0
      %611 = vmatpush1.bf16.msra.mxu0 %v580
      %612 = vmatprep.subr.bf16.mxu0 0
      %613 = vmatpush2.bf16.msra.mxu0 0
      %614 = vmatprep.subr.bf16.mxu0 0
      %615 = vmatpush2.bf16.msra.mxu0 0
      %616 = vmatprep.subr.bf16.mxu0 0
      %617 = vmatpush2.bf16.msra.mxu0 0
      %618 = vmatprep.subr.bf16.mxu0 0
      %619 = vmatpush2.bf16.msra.mxu0 0
      %620 = vmatprep.subr.bf16.mxu0 0
      %621 = vmatpush2.bf16.msra.mxu0 0
      %622 = vmatprep.subr.bf16.mxu0 0
      %623 = vmatpush2.bf16.msra.mxu0 0
      %624 = vmatprep.subr.bf16.mxu0 0
      %625 = vmatpush2.bf16.msra.mxu0 0
      %626 = vmatprep.subr.bf16.mxu0 0
      %627 = vmatpush2.bf16.msra.mxu0 0
      %628 = vmatprep.mubr.bf16.mxu0 0
      %629 = vmatmul.mubr.bf16.gmra.mxu0 %v532
      %v630 = vpop.f32.mrf.mxu0
      %v631 = vadd.f32 %v499, %v630
      %v632 = vpop.f32.mrf.mxu0
      %v633 = vpop.f32.mrf.mxu0
      %v634 = vadd.f32 %v499, %v633
      %v635 = vpop.f32.mrf.mxu0
      %636 = vmatprep.mubr.bf16.mxu0 0
      %637 = vmatmul.mubr.bf16.gmra.mxu0 %v533
      %v638 = vpop.f32.mrf.mxu0
      %v639 = vadd.f32 %v499, %v638
      %v640 = vpop.f32.mrf.mxu0
      %v641 = vpop.f32.mrf.mxu0
      %v642 = vadd.f32 %v499, %v641
      %v643 = vpop.f32.mrf.mxu0
      %644 = vmatprep.mubr.bf16.mxu0 0
      %645 = vmatmul.mubr.bf16.gmra.mxu0 %v534
      %v646 = vpop.f32.mrf.mxu0
      %v647 = vadd.f32 %v499, %v646
      %v648 = vpop.f32.mrf.mxu0
      %v649 = vpop.f32.mrf.mxu0
      %v650 = vadd.f32 %v499, %v649
      %v651 = vpop.f32.mrf.mxu0
      %652 = vmatprep.mubr.bf16.mxu0 0
      %653 = vmatmul.mubr.bf16.gmra.mxu0 %v535
      %v654 = vpop.f32.mrf.mxu0
      %v655 = vadd.f32 %v499, %v654
      %v656 = vpop.f32.mrf.mxu0
      %v657 = vpop.f32.mrf.mxu0
      %v658 = vadd.f32 %v499, %v657
      %v659 = vpop.f32.mrf.mxu0
      %660 = vmatprep.mubr.bf16.mxu0 0
      %661 = vmatmul.mubr.bf16.gmra.mxu0 %v536
      %v662 = vpop.f32.mrf.mxu0
      %v663 = vadd.f32 %v499, %v662
      %v664 = vpop.f32.mrf.mxu0
      %v665 = vpop.f32.mrf.mxu0
      %v666 = vadd.f32 %v499, %v665
      %v667 = vpop.f32.mrf.mxu0
      %668 = vmatprep.mubr.bf16.mxu0 0
      %669 = vmatmul.mubr.bf16.gmra.mxu0 %v537
      %v670 = vpop.f32.mrf.mxu0
      %v671 = vadd.f32 %v499, %v670
      %v672 = vpop.f32.mrf.mxu0
      %v673 = vpop.f32.mrf.mxu0
      %v674 = vadd.f32 %v499, %v673
      %v675 = vpop.f32.mrf.mxu0
      %676 = vmatprep.mubr.bf16.mxu0 0
      %677 = vmatmul.mubr.bf16.gmra.mxu0 %v538
      %v678 = vpop.f32.mrf.mxu0
      %v679 = vadd.f32 %v499, %v678
      %v680 = vpop.f32.mrf.mxu0
      %v681 = vpop.f32.mrf.mxu0
      %v682 = vadd.f32 %v499, %v681
      %v683 = vpop.f32.mrf.mxu0
      %684 = vmatprep.mubr.bf16.mxu0 0
      %685 = vmatmul.mubr.bf16.gmra.mxu0 %v539
      %v686 = vpop.f32.mrf.mxu0
      %v687 = vadd.f32 %v499, %v686
      %v688 = vpop.f32.mrf.mxu0
      %v689 = vpop.f32.mrf.mxu0
      %v690 = vadd.f32 %v499, %v689
      %v691 = vpop.f32.mrf.mxu0
      %692 = vdwg.mxu0
      %v693 = vmax.f32 %v631, 0.0
      %v694 = vmax.f32 %v634, 0.0
      %v695 = vmax.f32 %v639, 0.0
      %v696 = vmax.f32 %v642, 0.0
      %v697 = vmax.f32 %v647, 0.0
      %v698 = vmax.f32 %v650, 0.0
      %v699 = vmax.f32 %v655, 0.0
      %v700 = vmax.f32 %v658, 0.0
      %v701 = vmax.f32 %v663, 0.0
      %v702 = vmax.f32 %v666, 0.0
      %v703 = vmax.f32 %v671, 0.0
      %v704 = vmax.f32 %v674, 0.0
      %v705 = vmax.f32 %v679, 0.0
      %v706 = vmax.f32 %v682, 0.0
      %v707 = vmax.f32 %v687, 0.0
      %v708 = vmax.f32 %v690, 0.0
      %v709 = vpack.c.bf16 %v694, %v693
      %v710 = vpack.c.bf16 %v696, %v695
      %v711 = vpack.c.bf16 %v698, %v697
      %v712 = vpack.c.bf16 %v700, %v699
      %v713 = vpack.c.bf16 %v702, %v701
      %v714 = vpack.c.bf16 %v704, %v703
      %v715 = vpack.c.bf16 %v706, %v705
      %v716 = vpack.c.bf16 %v708, %v707
      %v717 = vld [vmem:[%s3] sm:$0xf]
      %v718 = vld [vmem:[%s3 + $0x4] sm:$0xf]
      %v719 = vld [vmem:[%s3 + $0x8] sm:$0xf]
      %v720 = vld [vmem:[%s3 + $0xc] sm:$0xf]
      %v721 = vld [vmem:[%s3 + $0x10] sm:$0xf]
      %v722 = vld [vmem:[%s3 + $0x14] sm:$0xf]
      %v723 = vld [vmem:[%s3 + $0x18] sm:$0xf]
      %v724 = vld [vmem:[%s3 + $0x1c] sm:$0xf]
      %v725 = vld [vmem:[%s3 + $0x20] sm:$0xf]
      %v726 = vld [vmem:[%s3 + $0x24] sm:$0xf]
      %v727 = vld [vmem:[%s3 + $0x28] sm:$0xf]
      %v728 = vld [vmem:[%s3 + $0x2c] sm:$0xf]
      %v729 = vld [vmem:[%s3 + $0x30] sm:$0xf]
      %v730 = vld [vmem:[%s3 + $0x34] sm:$0xf]
      %v731 = vld [vmem:[%s3 + $0x38] sm:$0xf]
      %v732 = vld [vmem:[%s3 + $0x3c] sm:$0xf]
      %v733 = vlaneseq
      %v734 = vshrl.u32 %v733, 7
      %v735 = vsub.s32 1, %v734
      %v736 = vrot.slane %v479, %v735
      %v753 = vunpack.c.l.b16 %v717
      %v754 = vunpack.c.l.b16 %v718
      %v755 = vunpack.c.l.b16 %v719
      %v756 = vunpack.c.l.b16 %v720
      %v757 = vunpack.c.l.b16 %v721
      %v758 = vunpack.c.l.b16 %v722
      %v759 = vunpack.c.l.b16 %v723
      %v760 = vunpack.c.l.b16 %v724
      %v761 = vunpack.c.l.b16 %v725
      %v762 = vunpack.c.l.b16 %v726
      %v763 = vunpack.c.l.b16 %v727
      %v764 = vunpack.c.l.b16 %v728
      %v765 = vunpack.c.l.b16 %v729
      %v766 = vunpack.c.l.b16 %v730
      %v767 = vunpack.c.l.b16 %v731
      %v768 = vunpack.c.l.b16 %v732
      %v769 = vpack.c.b16 %v754, %v753
      %v770 = vpack.c.b16 %v756, %v755
      %v771 = vpack.c.b16 %v758, %v757
      %v772 = vpack.c.b16 %v760, %v759
      %v773 = vpack.c.b16 %v762, %v761
      %v774 = vpack.c.b16 %v764, %v763
      %v775 = vpack.c.b16 %v766, %v765
      %v776 = vpack.c.b16 %v768, %v767
      %785 = vmatprep.subr.bf16.mxu0 0
      %786 = vmatpush1.bf16.msra.mxu0 %v776
      %787 = vmatprep.subr.bf16.mxu0 0
      %788 = vmatpush1.bf16.msra.mxu0 %v775
      %789 = vmatprep.subr.bf16.mxu0 0
      %790 = vmatpush1.bf16.msra.mxu0 %v774
      %791 = vmatprep.subr.bf16.mxu0 0
      %792 = vmatpush1.bf16.msra.mxu0 %v773
      %793 = vmatprep.subr.bf16.mxu0 0
      %794 = vmatpush1.bf16.msra.mxu0 %v772
      %795 = vmatprep.subr.bf16.mxu0 0
      %796 = vmatpush1.bf16.msra.mxu0 %v771
      %797 = vmatprep.subr.bf16.mxu0 0
      %798 = vmatpush1.bf16.msra.mxu0 %v770
      %799 = vmatprep.subr.bf16.mxu0 0
      %800 = vmatpush1.bf16.msra.mxu0 %v769
      %801 = vmatprep.subr.bf16.mxu0 0
      %802 = vmatpush2.bf16.msra.mxu0 0
      %803 = vmatprep.subr.bf16.mxu0 0
      %804 = vmatpush2.bf16.msra.mxu0 0
      %805 = vmatprep.subr.bf16.mxu0 0
      %806 = vmatpush2.bf16.msra.mxu0 0
      %807 = vmatprep.subr.bf16.mxu0 0
      %808 = vmatpush2.bf16.msra.mxu0 0
      %809 = vmatprep.subr.bf16.mxu0 0
      %810 = vmatpush2.bf16.msra.mxu0 0
      %811 = vmatprep.subr.bf16.mxu0 0
      %812 = vmatpush2.bf16.msra.mxu0 0
      %813 = vmatprep.subr.bf16.mxu0 0
      %814 = vmatpush2.bf16.msra.mxu0 0
      %815 = vmatprep.subr.bf16.mxu0 0
      %816 = vmatpush2.bf16.msra.mxu0 0
      %817 = vmatprep.mubr.bf16.mxu0 0
      %818 = vmatmul.mubr.bf16.gmra.mxu0 %v709
      %v819 = vpop.f32.mrf.mxu0
      %v820 = vadd.f32 %v736, %v819
      %v821 = vpop.f32.mrf.mxu0
      %v822 = vpop.f32.mrf.mxu0
      %v823 = vadd.f32 %v736, %v822
      %v824 = vpop.f32.mrf.mxu0
      %825 = vmatprep.mubr.bf16.mxu0 0
      %826 = vmatmul.mubr.bf16.gmra.mxu0 %v710
      %v827 = vpop.f32.mrf.mxu0
      %v828 = vadd.f32 %v736, %v827
      %v829 = vpop.f32.mrf.mxu0
      %v830 = vpop.f32.mrf.mxu0
      %v831 = vadd.f32 %v736, %v830
      %v832 = vpop.f32.mrf.mxu0
      %833 = vmatprep.mubr.bf16.mxu0 0
      %834 = vmatmul.mubr.bf16.gmra.mxu0 %v711
      %v835 = vpop.f32.mrf.mxu0
      %v836 = vadd.f32 %v736, %v835
      %v837 = vpop.f32.mrf.mxu0
      %v838 = vpop.f32.mrf.mxu0
      %v839 = vadd.f32 %v736, %v838
      %v840 = vpop.f32.mrf.mxu0
      %841 = vmatprep.mubr.bf16.mxu0 0
      %842 = vmatmul.mubr.bf16.gmra.mxu0 %v712
      %v843 = vpop.f32.mrf.mxu0
      %v844 = vadd.f32 %v736, %v843
      %v845 = vpop.f32.mrf.mxu0
      %v846 = vpop.f32.mrf.mxu0
      %v847 = vadd.f32 %v736, %v846
      %v848 = vpop.f32.mrf.mxu0
      %849 = vmatprep.mubr.bf16.mxu0 0
      %850 = vmatmul.mubr.bf16.gmra.mxu0 %v713
      %v851 = vpop.f32.mrf.mxu0
      %v852 = vadd.f32 %v736, %v851
      %v853 = vpop.f32.mrf.mxu0
      %v854 = vpop.f32.mrf.mxu0
      %v855 = vadd.f32 %v736, %v854
      %v856 = vpop.f32.mrf.mxu0
      %857 = vmatprep.mubr.bf16.mxu0 0
      %858 = vmatmul.mubr.bf16.gmra.mxu0 %v714
      %v859 = vpop.f32.mrf.mxu0
      %v860 = vadd.f32 %v736, %v859
      %v861 = vpop.f32.mrf.mxu0
      %v862 = vpop.f32.mrf.mxu0
      %v863 = vadd.f32 %v736, %v862
      %v864 = vpop.f32.mrf.mxu0
      %865 = vmatprep.mubr.bf16.mxu0 0
      %866 = vmatmul.mubr.bf16.gmra.mxu0 %v715
      %v867 = vpop.f32.mrf.mxu0
      %v868 = vadd.f32 %v736, %v867
      %v869 = vpop.f32.mrf.mxu0
      %v870 = vpop.f32.mrf.mxu0
      %v871 = vadd.f32 %v736, %v870
      %v872 = vpop.f32.mrf.mxu0
      %873 = vmatprep.mubr.bf16.mxu0 0
      %874 = vmatmul.mubr.bf16.gmra.mxu0 %v716
      %v875 = vpop.f32.mrf.mxu0
      %v876 = vadd.f32 %v736, %v875
      %v877 = vpop.f32.mrf.mxu0
      %v878 = vpop.f32.mrf.mxu0
      %v879 = vadd.f32 %v736, %v878
      %v880 = vpop.f32.mrf.mxu0
      %881 = vdwg.mxu0
      %v882 = vmax.f32 %v820, 0.0
      %v883 = vmax.f32 %v823, 0.0
      %v884 = vmax.f32 %v828, 0.0
      %v885 = vmax.f32 %v831, 0.0
      %v886 = vmax.f32 %v836, 0.0
      %v887 = vmax.f32 %v839, 0.0
      %v888 = vmax.f32 %v844, 0.0
      %v889 = vmax.f32 %v847, 0.0
      %v890 = vmax.f32 %v852, 0.0
      %v891 = vmax.f32 %v855, 0.0
      %v892 = vmax.f32 %v860, 0.0
      %v893 = vmax.f32 %v863, 0.0
      %v894 = vmax.f32 %v868, 0.0
      %v895 = vmax.f32 %v871, 0.0
      %v896 = vmax.f32 %v876, 0.0
      %v897 = vmax.f32 %v879, 0.0
      %v898 = vld [vmem:[%s4] sm:$0xf]
      %v899 = vld [vmem:[%s4 + $0x4] sm:$0xf]
      %v900 = vld [vmem:[%s4 + $0x8] sm:$0xf]
      %v901 = vld [vmem:[%s4 + $0xc] sm:$0xf]
      %v902 = vld [vmem:[%s4 + $0x10] sm:$0xf]
      %v903 = vld [vmem:[%s4 + $0x14] sm:$0xf]
      %v904 = vld [vmem:[%s4 + $0x18] sm:$0xf]
      %v905 = vld [vmem:[%s4 + $0x1c] sm:$0xf]
      %v906 = vld [vmem:[%s4 + $0x20] sm:$0xf]
      %v907 = vld [vmem:[%s4 + $0x24] sm:$0xf]
      %v908 = vld [vmem:[%s4 + $0x28] sm:$0xf]
      %v909 = vld [vmem:[%s4 + $0x2c] sm:$0xf]
      %v910 = vld [vmem:[%s4 + $0x30] sm:$0xf]
      %v911 = vld [vmem:[%s4 + $0x34] sm:$0xf]
      %v912 = vld [vmem:[%s4 + $0x38] sm:$0xf]
      %v913 = vld [vmem:[%s4 + $0x3c] sm:$0xf]
      %v914 = vlaneseq
      %v915 = vshrl.u32 %v914, 7
      %v916 = vsub.s32 2, %v915
      %v917 = vrot.slane %v479, %v916
      %v934 = vunpack.c.l.b16 %v463
      %v935 = vunpack.c.l.b16 %v464
      %v936 = vunpack.c.l.b16 %v465
      %v937 = vunpack.c.l.b16 %v466
      %v938 = vunpack.c.l.b16 %v467
      %v939 = vunpack.c.l.b16 %v468
      %v940 = vunpack.c.l.b16 %v469
      %v941 = vunpack.c.l.b16 %v470
      %v942 = vunpack.c.l.b16 %v471
      %v943 = vunpack.c.l.b16 %v472
      %v944 = vunpack.c.l.b16 %v473
      %v945 = vunpack.c.l.b16 %v474
      %v946 = vunpack.c.l.b16 %v475
      %v947 = vunpack.c.l.b16 %v476
      %v948 = vunpack.c.l.b16 %v477
      %v949 = vunpack.c.l.b16 %v478
      %v950 = vpack.c.b16 %v935, %v934
      %v951 = vpack.c.b16 %v937, %v936
      %v952 = vpack.c.b16 %v939, %v938
      %v953 = vpack.c.b16 %v941, %v940
      %v954 = vpack.c.b16 %v943, %v942
      %v955 = vpack.c.b16 %v945, %v944
      %v956 = vpack.c.b16 %v947, %v946
      %v957 = vpack.c.b16 %v949, %v948
      %v982 = vunpack.c.l.b16 %v898
      %v983 = vunpack.c.l.b16 %v899
      %v984 = vunpack.c.l.b16 %v900
      %v985 = vunpack.c.l.b16 %v901
      %v986 = vunpack.c.l.b16 %v902
      %v987 = vunpack.c.l.b16 %v903
      %v988 = vunpack.c.l.b16 %v904
      %v989 = vunpack.c.l.b16 %v905
      %v990 = vunpack.c.l.b16 %v906
      %v991 = vunpack.c.l.b16 %v907
      %v992 = vunpack.c.l.b16 %v908
      %v993 = vunpack.c.l.b16 %v909
      %v994 = vunpack.c.l.b16 %v910
      %v995 = vunpack.c.l.b16 %v911
      %v996 = vunpack.c.l.b16 %v912
      %v997 = vunpack.c.l.b16 %v913
      %v998 = vpack.c.b16 %v983, %v982
      %v999 = vpack.c.b16 %v985, %v984
      %v1000 = vpack.c.b16 %v987, %v986
      %v1001 = vpack.c.b16 %v989, %v988
      %v1002 = vpack.c.b16 %v991, %v990
      %v1003 = vpack.c.b16 %v993, %v992
      %v1004 = vpack.c.b16 %v995, %v994
      %v1005 = vpack.c.b16 %v997, %v996
      %1014 = vmatprep.subr.bf16.mxu0 0
      %1015 = vmatpush1.bf16.msra.mxu0 %v1005
      %1016 = vmatprep.subr.bf16.mxu0 0
      %1017 = vmatpush1.bf16.msra.mxu0 %v1004
      %1018 = vmatprep.subr.bf16.mxu0 0
      %1019 = vmatpush1.bf16.msra.mxu0 %v1003
      %1020 = vmatprep.subr.bf16.mxu0 0
      %1021 = vmatpush1.bf16.msra.mxu0 %v1002
      %1022 = vmatprep.subr.bf16.mxu0 0
      %1023 = vmatpush1.bf16.msra.mxu0 %v1001
      %1024 = vmatprep.subr.bf16.mxu0 0
      %1025 = vmatpush1.bf16.msra.mxu0 %v1000
      %1026 = vmatprep.subr.bf16.mxu0 0
      %1027 = vmatpush1.bf16.msra.mxu0 %v999
      %1028 = vmatprep.subr.bf16.mxu0 0
      %1029 = vmatpush1.bf16.msra.mxu0 %v998
      %1030 = vmatprep.subr.bf16.mxu0 0
      %1031 = vmatpush2.bf16.msra.mxu0 0
      %1032 = vmatprep.subr.bf16.mxu0 0
      %1033 = vmatpush2.bf16.msra.mxu0 0
      %1034 = vmatprep.subr.bf16.mxu0 0
      %1035 = vmatpush2.bf16.msra.mxu0 0
      %1036 = vmatprep.subr.bf16.mxu0 0
      %1037 = vmatpush2.bf16.msra.mxu0 0
      %1038 = vmatprep.subr.bf16.mxu0 0
      %1039 = vmatpush2.bf16.msra.mxu0 0
      %1040 = vmatprep.subr.bf16.mxu0 0
      %1041 = vmatpush2.bf16.msra.mxu0 0
      %1042 = vmatprep.subr.bf16.mxu0 0
      %1043 = vmatpush2.bf16.msra.mxu0 0
      %1044 = vmatprep.subr.bf16.mxu0 0
      %1045 = vmatpush2.bf16.msra.mxu0 0
      %1046 = vmatprep.mubr.bf16.mxu0 0
      %1047 = vmatmul.mubr.bf16.gmra.mxu0 %v950
      %v1048 = vpop.f32.mrf.mxu0
      %v1049 = vadd.f32 %v917, %v1048
      %v1050 = vpop.f32.mrf.mxu0
      %v1051 = vpop.f32.mrf.mxu0
      %v1052 = vadd.f32 %v917, %v1051
      %v1053 = vpop.f32.mrf.mxu0
      %1054 = vmatprep.mubr.bf16.mxu0 0
      %1055 = vmatmul.mubr.bf16.gmra.mxu0 %v951
      %v1056 = vpop.f32.mrf.mxu0
      %v1057 = vadd.f32 %v917, %v1056
      %v1058 = vpop.f32.mrf.mxu0
      %v1059 = vpop.f32.mrf.mxu0
      %v1060 = vadd.f32 %v917, %v1059
      %v1061 = vpop.f32.mrf.mxu0
      %1062 = vmatprep.mubr.bf16.mxu0 0
      %1063 = vmatmul.mubr.bf16.gmra.mxu0 %v952
      %v1064 = vpop.f32.mrf.mxu0
      %v1065 = vadd.f32 %v917, %v1064
      %v1066 = vpop.f32.mrf.mxu0
      %v1067 = vpop.f32.mrf.mxu0
      %v1068 = vadd.f32 %v917, %v1067
      %v1069 = vpop.f32.mrf.mxu0
      %1070 = vmatprep.mubr.bf16.mxu0 0
      %1071 = vmatmul.mubr.bf16.gmra.mxu0 %v953
      %v1072 = vpop.f32.mrf.mxu0
      %v1073 = vadd.f32 %v917, %v1072
      %v1074 = vpop.f32.mrf.mxu0
      %v1075 = vpop.f32.mrf.mxu0
      %v1076 = vadd.f32 %v917, %v1075
      %v1077 = vpop.f32.mrf.mxu0
      %1078 = vmatprep.mubr.bf16.mxu0 0
      %1079 = vmatmul.mubr.bf16.gmra.mxu0 %v954
      %v1080 = vpop.f32.mrf.mxu0
      %v1081 = vadd.f32 %v917, %v1080
      %v1082 = vpop.f32.mrf.mxu0
      %v1083 = vpop.f32.mrf.mxu0
      %v1084 = vadd.f32 %v917, %v1083
      %v1085 = vpop.f32.mrf.mxu0
      %1086 = vmatprep.mubr.bf16.mxu0 0
      %1087 = vmatmul.mubr.bf16.gmra.mxu0 %v955
      %v1088 = vpop.f32.mrf.mxu0
      %v1089 = vadd.f32 %v917, %v1088
      %v1090 = vpop.f32.mrf.mxu0
      %v1091 = vpop.f32.mrf.mxu0
      %v1092 = vadd.f32 %v917, %v1091
      %v1093 = vpop.f32.mrf.mxu0
      %1094 = vmatprep.mubr.bf16.mxu0 0
      %1095 = vmatmul.mubr.bf16.gmra.mxu0 %v956
      %v1096 = vpop.f32.mrf.mxu0
      %v1097 = vadd.f32 %v917, %v1096
      %v1098 = vpop.f32.mrf.mxu0
      %v1099 = vpop.f32.mrf.mxu0
      %v1100 = vadd.f32 %v917, %v1099
      %v1101 = vpop.f32.mrf.mxu0
      %1102 = vmatprep.mubr.bf16.mxu0 0
      %1103 = vmatmul.mubr.bf16.gmra.mxu0 %v957
      %v1104 = vpop.f32.mrf.mxu0
      %v1105 = vadd.f32 %v917, %v1104
      %v1106 = vpop.f32.mrf.mxu0
      %v1107 = vpop.f32.mrf.mxu0
      %v1108 = vadd.f32 %v917, %v1107
      %v1109 = vpop.f32.mrf.mxu0
      %1110 = vdwg.mxu0
      %v1111 = vmax.f32 %v1049, 0.0
      %v1112 = vmax.f32 %v1052, 0.0
      %v1113 = vmax.f32 %v1057, 0.0
      %v1114 = vmax.f32 %v1060, 0.0
      %v1115 = vmax.f32 %v1065, 0.0
      %v1116 = vmax.f32 %v1068, 0.0
      %v1117 = vmax.f32 %v1073, 0.0
      %v1118 = vmax.f32 %v1076, 0.0
      %v1119 = vmax.f32 %v1081, 0.0
      %v1120 = vmax.f32 %v1084, 0.0
      %v1121 = vmax.f32 %v1089, 0.0
      %v1122 = vmax.f32 %v1092, 0.0
      %v1123 = vmax.f32 %v1097, 0.0
      %v1124 = vmax.f32 %v1100, 0.0
      %v1125 = vmax.f32 %v1105, 0.0
      %v1126 = vmax.f32 %v1108, 0.0
      %v1127 = vpack.c.bf16 %v1112, %v1111
      %v1128 = vpack.c.bf16 %v1114, %v1113
      %v1129 = vpack.c.bf16 %v1116, %v1115
      %v1130 = vpack.c.bf16 %v1118, %v1117
      %v1131 = vpack.c.bf16 %v1120, %v1119
      %v1132 = vpack.c.bf16 %v1122, %v1121
      %v1133 = vpack.c.bf16 %v1124, %v1123
      %v1134 = vpack.c.bf16 %v1126, %v1125
      %v1135 = vld [vmem:[%s5] sm:$0xf]
      %v1136 = vld [vmem:[%s5 + $0x4] sm:$0xf]
      %v1137 = vld [vmem:[%s5 + $0x8] sm:$0xf]
      %v1138 = vld [vmem:[%s5 + $0xc] sm:$0xf]
      %v1139 = vld [vmem:[%s5 + $0x10] sm:$0xf]
      %v1140 = vld [vmem:[%s5 + $0x14] sm:$0xf]
      %v1141 = vld [vmem:[%s5 + $0x18] sm:$0xf]
      %v1142 = vld [vmem:[%s5 + $0x1c] sm:$0xf]
      %v1143 = vld [vmem:[%s5 + $0x20] sm:$0xf]
      %v1144 = vld [vmem:[%s5 + $0x24] sm:$0xf]
      %v1145 = vld [vmem:[%s5 + $0x28] sm:$0xf]
      %v1146 = vld [vmem:[%s5 + $0x2c] sm:$0xf]
      %v1147 = vld [vmem:[%s5 + $0x30] sm:$0xf]
      %v1148 = vld [vmem:[%s5 + $0x34] sm:$0xf]
      %v1149 = vld [vmem:[%s5 + $0x38] sm:$0xf]
      %v1150 = vld [vmem:[%s5 + $0x3c] sm:$0xf]
      %v1151 = vlaneseq
      %v1152 = vshrl.u32 %v1151, 7
      %v1153 = vsub.s32 3, %v1152
      %v1154 = vrot.slane %v479, %v1153
      %v1171 = vunpack.c.l.b16 %v1135
      %v1172 = vunpack.c.l.b16 %v1136
      %v1173 = vunpack.c.l.b16 %v1137
      %v1174 = vunpack.c.l.b16 %v1138
      %v1175 = vunpack.c.l.b16 %v1139
      %v1176 = vunpack.c.l.b16 %v1140
      %v1177 = vunpack.c.l.b16 %v1141
      %v1178 = vunpack.c.l.b16 %v1142
      %v1179 = vunpack.c.l.b16 %v1143
      %v1180 = vunpack.c.l.b16 %v1144
      %v1181 = vunpack.c.l.b16 %v1145
      %v1182 = vunpack.c.l.b16 %v1146
      %v1183 = vunpack.c.l.b16 %v1147
      %v1184 = vunpack.c.l.b16 %v1148
      %v1185 = vunpack.c.l.b16 %v1149
      %v1186 = vunpack.c.l.b16 %v1150
      %v1187 = vpack.c.b16 %v1172, %v1171
      %v1188 = vpack.c.b16 %v1174, %v1173
      %v1189 = vpack.c.b16 %v1176, %v1175
      %v1190 = vpack.c.b16 %v1178, %v1177
      %v1191 = vpack.c.b16 %v1180, %v1179
      %v1192 = vpack.c.b16 %v1182, %v1181
      %v1193 = vpack.c.b16 %v1184, %v1183
      %v1194 = vpack.c.b16 %v1186, %v1185
      %1203 = vmatprep.subr.bf16.mxu0 0
      %1204 = vmatpush1.bf16.msra.mxu0 %v1194
      %1205 = vmatprep.subr.bf16.mxu0 0
      %1206 = vmatpush1.bf16.msra.mxu0 %v1193
      %1207 = vmatprep.subr.bf16.mxu0 0
      %1208 = vmatpush1.bf16.msra.mxu0 %v1192
      %1209 = vmatprep.subr.bf16.mxu0 0
      %1210 = vmatpush1.bf16.msra.mxu0 %v1191
      %1211 = vmatprep.subr.bf16.mxu0 0
      %1212 = vmatpush1.bf16.msra.mxu0 %v1190
      %1213 = vmatprep.subr.bf16.mxu0 0
      %1214 = vmatpush1.bf16.msra.mxu0 %v1189
      %1215 = vmatprep.subr.bf16.mxu0 0
      %1216 = vmatpush1.bf16.msra.mxu0 %v1188
      %1217 = vmatprep.subr.bf16.mxu0 0
      %1218 = vmatpush1.bf16.msra.mxu0 %v1187
      %1219 = vmatprep.subr.bf16.mxu0 0
      %1220 = vmatpush2.bf16.msra.mxu0 0
      %1221 = vmatprep.subr.bf16.mxu0 0
      %1222 = vmatpush2.bf16.msra.mxu0 0
      %1223 = vmatprep.subr.bf16.mxu0 0
      %1224 = vmatpush2.bf16.msra.mxu0 0
      %1225 = vmatprep.subr.bf16.mxu0 0
      %1226 = vmatpush2.bf16.msra.mxu0 0
      %1227 = vmatprep.subr.bf16.mxu0 0
      %1228 = vmatpush2.bf16.msra.mxu0 0
      %1229 = vmatprep.subr.bf16.mxu0 0
      %1230 = vmatpush2.bf16.msra.mxu0 0
      %1231 = vmatprep.subr.bf16.mxu0 0
      %1232 = vmatpush2.bf16.msra.mxu0 0
      %1233 = vmatprep.subr.bf16.mxu0 0
      %1234 = vmatpush2.bf16.msra.mxu0 0
      %1235 = vmatprep.mubr.bf16.mxu0 0
      %1236 = vmatmul.mubr.bf16.gmra.mxu0 %v1127
      %v1237 = vpop.f32.mrf.mxu0
      %v1238 = vadd.f32 %v1154, %v1237
      %v1239 = vpop.f32.mrf.mxu0
      %v1240 = vpop.f32.mrf.mxu0
      %v1241 = vadd.f32 %v1154, %v1240
      %v1242 = vpop.f32.mrf.mxu0
      %1243 = vmatprep.mubr.bf16.mxu0 0
      %1244 = vmatmul.mubr.bf16.gmra.mxu0 %v1128
      %v1245 = vpop.f32.mrf.mxu0
      %v1246 = vadd.f32 %v1154, %v1245
      %v1247 = vpop.f32.mrf.mxu0
      %v1248 = vpop.f32.mrf.mxu0
      %v1249 = vadd.f32 %v1154, %v1248
      %v1250 = vpop.f32.mrf.mxu0
      %1251 = vmatprep.mubr.bf16.mxu0 0
      %1252 = vmatmul.mubr.bf16.gmra.mxu0 %v1129
      %v1253 = vpop.f32.mrf.mxu0
      %v1254 = vadd.f32 %v1154, %v1253
      %v1255 = vpop.f32.mrf.mxu0
      %v1256 = vpop.f32.mrf.mxu0
      %v1257 = vadd.f32 %v1154, %v1256
      %v1258 = vpop.f32.mrf.mxu0
      %1259 = vmatprep.mubr.bf16.mxu0 0
      %1260 = vmatmul.mubr.bf16.gmra.mxu0 %v1130
      %v1261 = vpop.f32.mrf.mxu0
      %v1262 = vadd.f32 %v1154, %v1261
      %v1263 = vpop.f32.mrf.mxu0
      %v1264 = vpop.f32.mrf.mxu0
      %v1265 = vadd.f32 %v1154, %v1264
      %v1266 = vpop.f32.mrf.mxu0
      %1267 = vmatprep.mubr.bf16.mxu0 0
      %1268 = vmatmul.mubr.bf16.gmra.mxu0 %v1131
      %v1269 = vpop.f32.mrf.mxu0
      %v1270 = vadd.f32 %v1154, %v1269
      %v1271 = vpop.f32.mrf.mxu0
      %v1272 = vpop.f32.mrf.mxu0
      %v1273 = vadd.f32 %v1154, %v1272
      %v1274 = vpop.f32.mrf.mxu0
      %1275 = vmatprep.mubr.bf16.mxu0 0
      %1276 = vmatmul.mubr.bf16.gmra.mxu0 %v1132
      %v1277 = vpop.f32.mrf.mxu0
      %v1278 = vadd.f32 %v1154, %v1277
      %v1279 = vpop.f32.mrf.mxu0
      %v1280 = vpop.f32.mrf.mxu0
      %v1281 = vadd.f32 %v1154, %v1280
      %v1282 = vpop.f32.mrf.mxu0
      %1283 = vmatprep.mubr.bf16.mxu0 0
      %1284 = vmatmul.mubr.bf16.gmra.mxu0 %v1133
      %v1285 = vpop.f32.mrf.mxu0
      %v1286 = vadd.f32 %v1154, %v1285
      %v1287 = vpop.f32.mrf.mxu0
      %v1288 = vpop.f32.mrf.mxu0
      %v1289 = vadd.f32 %v1154, %v1288
      %v1290 = vpop.f32.mrf.mxu0
      %1291 = vmatprep.mubr.bf16.mxu0 0
      %1292 = vmatmul.mubr.bf16.gmra.mxu0 %v1134
      %v1293 = vpop.f32.mrf.mxu0
      %v1294 = vadd.f32 %v1154, %v1293
      %v1295 = vpop.f32.mrf.mxu0
      %v1296 = vpop.f32.mrf.mxu0
      %v1297 = vadd.f32 %v1154, %v1296
      %v1298 = vpop.f32.mrf.mxu0
      %1299 = vdwg.mxu0
      %v1300 = vmax.f32 %v1238, 0.0
      %v1301 = vmax.f32 %v1241, 0.0
      %v1302 = vmax.f32 %v1246, 0.0
      %v1303 = vmax.f32 %v1249, 0.0
      %v1304 = vmax.f32 %v1254, 0.0
      %v1305 = vmax.f32 %v1257, 0.0
      %v1306 = vmax.f32 %v1262, 0.0
      %v1307 = vmax.f32 %v1265, 0.0
      %v1308 = vmax.f32 %v1270, 0.0
      %v1309 = vmax.f32 %v1273, 0.0
      %v1310 = vmax.f32 %v1278, 0.0
      %v1311 = vmax.f32 %v1281, 0.0
      %v1312 = vmax.f32 %v1286, 0.0
      %v1313 = vmax.f32 %v1289, 0.0
      %v1314 = vmax.f32 %v1294, 0.0
      %v1315 = vmax.f32 %v1297, 0.0
      %v1316 = vld [vmem:[%s6] sm:$0xf]
      %v1317 = vld [vmem:[%s6 + $0x4] sm:$0xf]
      %v1318 = vld [vmem:[%s6 + $0x8] sm:$0xf]
      %v1319 = vld [vmem:[%s6 + $0xc] sm:$0xf]
      %v1320 = vld [vmem:[%s6 + $0x10] sm:$0xf]
      %v1321 = vld [vmem:[%s6 + $0x14] sm:$0xf]
      %v1322 = vld [vmem:[%s6 + $0x18] sm:$0xf]
      %v1323 = vld [vmem:[%s6 + $0x1c] sm:$0xf]
      %v1324 = vld [vmem:[%s6 + $0x20] sm:$0xf]
      %v1325 = vld [vmem:[%s6 + $0x24] sm:$0xf]
      %v1326 = vld [vmem:[%s6 + $0x28] sm:$0xf]
      %v1327 = vld [vmem:[%s6 + $0x2c] sm:$0xf]
      %v1328 = vld [vmem:[%s6 + $0x30] sm:$0xf]
      %v1329 = vld [vmem:[%s6 + $0x34] sm:$0xf]
      %v1330 = vld [vmem:[%s6 + $0x38] sm:$0xf]
      %v1331 = vld [vmem:[%s6 + $0x3c] sm:$0xf]
      %v1332 = vlaneseq
      %v1333 = vshrl.u32 %v1332, 7
      %v1334 = vsub.s32 4, %v1333
      %v1335 = vrot.slane %v479, %v1334
      %v1352 = vunpack.c.l.b16 %v1316
      %v1353 = vunpack.c.l.b16 %v1317
      %v1354 = vunpack.c.l.b16 %v1318
      %v1355 = vunpack.c.l.b16 %v1319
      %v1356 = vunpack.c.l.b16 %v1320
      %v1357 = vunpack.c.l.b16 %v1321
      %v1358 = vunpack.c.l.b16 %v1322
      %v1359 = vunpack.c.l.b16 %v1323
      %v1360 = vunpack.c.l.b16 %v1324
      %v1361 = vunpack.c.l.b16 %v1325
      %v1362 = vunpack.c.l.b16 %v1326
      %v1363 = vunpack.c.l.b16 %v1327
      %v1364 = vunpack.c.l.b16 %v1328
      %v1365 = vunpack.c.l.b16 %v1329
      %v1366 = vunpack.c.l.b16 %v1330
      %v1367 = vunpack.c.l.b16 %v1331
      %v1368 = vpack.c.b16 %v1353, %v1352
      %v1369 = vpack.c.b16 %v1355, %v1354
      %v1370 = vpack.c.b16 %v1357, %v1356
      %v1371 = vpack.c.b16 %v1359, %v1358
      %v1372 = vpack.c.b16 %v1361, %v1360
      %v1373 = vpack.c.b16 %v1363, %v1362
      %v1374 = vpack.c.b16 %v1365, %v1364
      %v1375 = vpack.c.b16 %v1367, %v1366
      %1384 = vmatprep.subr.bf16.mxu0 0
      %1385 = vmatpush1.bf16.msra.mxu0 %v1375
      %1386 = vmatprep.subr.bf16.mxu0 0
      %1387 = vmatpush1.bf16.msra.mxu0 %v1374
      %1388 = vmatprep.subr.bf16.mxu0 0
      %1389 = vmatpush1.bf16.msra.mxu0 %v1373
      %1390 = vmatprep.subr.bf16.mxu0 0
      %1391 = vmatpush1.bf16.msra.mxu0 %v1372
      %1392 = vmatprep.subr.bf16.mxu0 0
      %1393 = vmatpush1.bf16.msra.mxu0 %v1371
      %1394 = vmatprep.subr.bf16.mxu0 0
      %1395 = vmatpush1.bf16.msra.mxu0 %v1370
      %1396 = vmatprep.subr.bf16.mxu0 0
      %1397 = vmatpush1.bf16.msra.mxu0 %v1369
      %1398 = vmatprep.subr.bf16.mxu0 0
      %1399 = vmatpush1.bf16.msra.mxu0 %v1368
      %1400 = vmatprep.subr.bf16.mxu0 0
      %1401 = vmatpush2.bf16.msra.mxu0 0
      %1402 = vmatprep.subr.bf16.mxu0 0
      %1403 = vmatpush2.bf16.msra.mxu0 0
      %1404 = vmatprep.subr.bf16.mxu0 0
      %1405 = vmatpush2.bf16.msra.mxu0 0
      %1406 = vmatprep.subr.bf16.mxu0 0
      %1407 = vmatpush2.bf16.msra.mxu0 0
      %1408 = vmatprep.subr.bf16.mxu0 0
      %1409 = vmatpush2.bf16.msra.mxu0 0
      %1410 = vmatprep.subr.bf16.mxu0 0
      %1411 = vmatpush2.bf16.msra.mxu0 0
      %1412 = vmatprep.subr.bf16.mxu0 0
      %1413 = vmatpush2.bf16.msra.mxu0 0
      %1414 = vmatprep.subr.bf16.mxu0 0
      %1415 = vmatpush2.bf16.msra.mxu0 0
      %1416 = vmatprep.mubr.bf16.mxu0 0
      %1417 = vmatmul.mubr.bf16.gmra.mxu0 %v950
      %v1418 = vpop.f32.mrf.mxu0
      %v1419 = vadd.f32 %v1335, %v1418
      %v1420 = vpop.f32.mrf.mxu0
      %v1421 = vpop.f32.mrf.mxu0
      %v1422 = vadd.f32 %v1335, %v1421
      %v1423 = vpop.f32.mrf.mxu0
      %1424 = vmatprep.mubr.bf16.mxu0 0
      %1425 = vmatmul.mubr.bf16.gmra.mxu0 %v951
      %v1426 = vpop.f32.mrf.mxu0
      %v1427 = vadd.f32 %v1335, %v1426
      %v1428 = vpop.f32.mrf.mxu0
      %v1429 = vpop.f32.mrf.mxu0
      %v1430 = vadd.f32 %v1335, %v1429
      %v1431 = vpop.f32.mrf.mxu0
      %1432 = vmatprep.mubr.bf16.mxu0 0
      %1433 = vmatmul.mubr.bf16.gmra.mxu0 %v952
      %v1434 = vpop.f32.mrf.mxu0
      %v1435 = vadd.f32 %v1335, %v1434
      %v1436 = vpop.f32.mrf.mxu0
      %v1437 = vpop.f32.mrf.mxu0
      %v1438 = vadd.f32 %v1335, %v1437
      %v1439 = vpop.f32.mrf.mxu0
      %1440 = vmatprep.mubr.bf16.mxu0 0
      %1441 = vmatmul.mubr.bf16.gmra.mxu0 %v953
      %v1442 = vpop.f32.mrf.mxu0
      %v1443 = vadd.f32 %v1335, %v1442
      %v1444 = vpop.f32.mrf.mxu0
      %v1445 = vpop.f32.mrf.mxu0
      %v1446 = vadd.f32 %v1335, %v1445
      %v1447 = vpop.f32.mrf.mxu0
      %1448 = vmatprep.mubr.bf16.mxu0 0
      %1449 = vmatmul.mubr.bf16.gmra.mxu0 %v954
      %v1450 = vpop.f32.mrf.mxu0
      %v1451 = vadd.f32 %v1335, %v1450
      %v1452 = vpop.f32.mrf.mxu0
      %v1453 = vpop.f32.mrf.mxu0
      %v1454 = vadd.f32 %v1335, %v1453
      %v1455 = vpop.f32.mrf.mxu0
      %1456 = vmatprep.mubr.bf16.mxu0 0
      %1457 = vmatmul.mubr.bf16.gmra.mxu0 %v955
      %v1458 = vpop.f32.mrf.mxu0
      %v1459 = vadd.f32 %v1335, %v1458
      %v1460 = vpop.f32.mrf.mxu0
      %v1461 = vpop.f32.mrf.mxu0
      %v1462 = vadd.f32 %v1335, %v1461
      %v1463 = vpop.f32.mrf.mxu0
      %1464 = vmatprep.mubr.bf16.mxu0 0
      %1465 = vmatmul.mubr.bf16.gmra.mxu0 %v956
      %v1466 = vpop.f32.mrf.mxu0
      %v1467 = vadd.f32 %v1335, %v1466
      %v1468 = vpop.f32.mrf.mxu0
      %v1469 = vpop.f32.mrf.mxu0
      %v1470 = vadd.f32 %v1335, %v1469
      %v1471 = vpop.f32.mrf.mxu0
      %1472 = vmatprep.mubr.bf16.mxu0 0
      %1473 = vmatmul.mubr.bf16.gmra.mxu0 %v957
      %v1474 = vpop.f32.mrf.mxu0
      %v1475 = vadd.f32 %v1335, %v1474
      %v1476 = vpop.f32.mrf.mxu0
      %v1477 = vpop.f32.mrf.mxu0
      %v1478 = vadd.f32 %v1335, %v1477
      %v1479 = vpop.f32.mrf.mxu0
      %1480 = vdwg.mxu0
      %v1481 = vmax.f32 %v1419, 0.0
      %v1482 = vmax.f32 %v1422, 0.0
      %v1483 = vmax.f32 %v1427, 0.0
      %v1484 = vmax.f32 %v1430, 0.0
      %v1485 = vmax.f32 %v1435, 0.0
      %v1486 = vmax.f32 %v1438, 0.0
      %v1487 = vmax.f32 %v1443, 0.0
      %v1488 = vmax.f32 %v1446, 0.0
      %v1489 = vmax.f32 %v1451, 0.0
      %v1490 = vmax.f32 %v1454, 0.0
      %v1491 = vmax.f32 %v1459, 0.0
      %v1492 = vmax.f32 %v1462, 0.0
      %v1493 = vmax.f32 %v1467, 0.0
      %v1494 = vmax.f32 %v1470, 0.0
      %v1495 = vmax.f32 %v1475, 0.0
      %v1496 = vmax.f32 %v1478, 0.0
      %v1497 = vpack.c.bf16 %v883, %v882
      %v1498 = vpack.c.bf16 %v885, %v884
      %v1499 = vpack.c.bf16 %v887, %v886
      %v1500 = vpack.c.bf16 %v889, %v888
      %v1501 = vpack.c.bf16 %v891, %v890
      %v1502 = vpack.c.bf16 %v893, %v892
      %v1503 = vpack.c.bf16 %v895, %v894
      %v1504 = vpack.c.bf16 %v897, %v896
      %v1505 = vpack.c.bf16 %v1301, %v1300
      %v1506 = vpack.c.bf16 %v1303, %v1302
      %v1507 = vpack.c.bf16 %v1305, %v1304
      %v1508 = vpack.c.bf16 %v1307, %v1306
      %v1509 = vpack.c.bf16 %v1309, %v1308
      %v1510 = vpack.c.bf16 %v1311, %v1310
      %v1511 = vpack.c.bf16 %v1313, %v1312
      %v1512 = vpack.c.bf16 %v1315, %v1314
      %1513 = vmatprep.subr.bf16.mxu0 0
      %1514 = vmatpush1.bf16.xpose.msra.mxu0 %v1512
      %1515 = vmatprep.subr.bf16.mxu0 0
      %1516 = vmatpush1.bf16.xpose.msra.mxu0 %v1511
      %1517 = vmatprep.subr.bf16.mxu0 0
      %1518 = vmatpush1.bf16.xpose.msra.mxu0 %v1510
      %1519 = vmatprep.subr.bf16.mxu0 0
      %1520 = vmatpush1.bf16.xpose.msra.mxu0 %v1509
      %1521 = vmatprep.subr.bf16.mxu0 0
      %1522 = vmatpush1.bf16.xpose.msra.mxu0 %v1508
      %1523 = vmatprep.subr.bf16.mxu0 0
      %1524 = vmatpush1.bf16.xpose.msra.mxu0 %v1507
      %1525 = vmatprep.subr.bf16.mxu0 0
      %1526 = vmatpush1.bf16.xpose.msra.mxu0 %v1506
      %1527 = vmatprep.subr.bf16.mxu0 0
      %1528 = vmatpush1.bf16.xpose.msra.mxu0 %v1505
      %1529 = vmatprep.subr.bf16.mxu0 0
      %1530 = vmatpush2.bf16.xpose.msra.mxu0 0
      %1531 = vmatprep.subr.bf16.mxu0 0
      %1532 = vmatpush2.bf16.xpose.msra.mxu0 0
      %1533 = vmatprep.subr.bf16.mxu0 0
      %1534 = vmatpush2.bf16.xpose.msra.mxu0 0
      %1535 = vmatprep.subr.bf16.mxu0 0
      %1536 = vmatpush2.bf16.xpose.msra.mxu0 0
      %1537 = vmatprep.subr.bf16.mxu0 0
      %1538 = vmatpush2.bf16.xpose.msra.mxu0 0
      %1539 = vmatprep.subr.bf16.mxu0 0
      %1540 = vmatpush2.bf16.xpose.msra.mxu0 0
      %1541 = vmatprep.subr.bf16.mxu0 0
      %1542 = vmatpush2.bf16.xpose.msra.mxu0 0
      %1543 = vmatprep.subr.bf16.mxu0 0
      %1544 = vmatpush2.bf16.xpose.msra.mxu0 0
      %1545 = vmatprep.mubr.bf16.mxu0 0
      %1546 = vmatmul.mubr.bf16.gmra.mxu0 %v1497
      %v1547 = vpop.f32.mrf.mxu0
      %v1548 = vadd.f32 0.0, %v1547
      %v1549 = vpop.f32.mrf.mxu0
      %v1550 = vpop.f32.mrf.mxu0
      %v1551 = vadd.f32 0.0, %v1550
      %v1552 = vpop.f32.mrf.mxu0
      %1553 = vmatprep.mubr.bf16.mxu0 0
      %1554 = vmatmul.mubr.bf16.gmra.mxu0 %v1498
      %v1555 = vpop.f32.mrf.mxu0
      %v1556 = vadd.f32 0.0, %v1555
      %v1557 = vpop.f32.mrf.mxu0
      %v1558 = vpop.f32.mrf.mxu0
      %v1559 = vadd.f32 0.0, %v1558
      %v1560 = vpop.f32.mrf.mxu0
      %1561 = vmatprep.mubr.bf16.mxu0 0
      %1562 = vmatmul.mubr.bf16.gmra.mxu0 %v1499
      %v1563 = vpop.f32.mrf.mxu0
      %v1564 = vadd.f32 0.0, %v1563
      %v1565 = vpop.f32.mrf.mxu0
      %v1566 = vpop.f32.mrf.mxu0
      %v1567 = vadd.f32 0.0, %v1566
      %v1568 = vpop.f32.mrf.mxu0
      %1569 = vmatprep.mubr.bf16.mxu0 0
      %1570 = vmatmul.mubr.bf16.gmra.mxu0 %v1500
      %v1571 = vpop.f32.mrf.mxu0
      %v1572 = vadd.f32 0.0, %v1571
      %v1573 = vpop.f32.mrf.mxu0
      %v1574 = vpop.f32.mrf.mxu0
      %v1575 = vadd.f32 0.0, %v1574
      %v1576 = vpop.f32.mrf.mxu0
      %1577 = vmatprep.mubr.bf16.mxu0 0
      %1578 = vmatmul.mubr.bf16.gmra.mxu0 %v1501
      %v1579 = vpop.f32.mrf.mxu0
      %v1580 = vadd.f32 0.0, %v1579
      %v1581 = vpop.f32.mrf.mxu0
      %v1582 = vpop.f32.mrf.mxu0
      %v1583 = vadd.f32 0.0, %v1582
      %v1584 = vpop.f32.mrf.mxu0
      %1585 = vmatprep.mubr.bf16.mxu0 0
      %1586 = vmatmul.mubr.bf16.gmra.mxu0 %v1502
      %v1587 = vpop.f32.mrf.mxu0
      %v1588 = vadd.f32 0.0, %v1587
      %v1589 = vpop.f32.mrf.mxu0
      %v1590 = vpop.f32.mrf.mxu0
      %v1591 = vadd.f32 0.0, %v1590
      %v1592 = vpop.f32.mrf.mxu0
      %1593 = vmatprep.mubr.bf16.mxu0 0
      %1594 = vmatmul.mubr.bf16.gmra.mxu0 %v1503
      %v1595 = vpop.f32.mrf.mxu0
      %v1596 = vadd.f32 0.0, %v1595
      %v1597 = vpop.f32.mrf.mxu0
      %v1598 = vpop.f32.mrf.mxu0
      %v1599 = vadd.f32 0.0, %v1598
      %v1600 = vpop.f32.mrf.mxu0
      %1601 = vmatprep.mubr.bf16.mxu0 0
      %1602 = vmatmul.mubr.bf16.gmra.mxu0 %v1504
      %v1603 = vpop.f32.mrf.mxu0
      %v1604 = vadd.f32 0.0, %v1603
      %v1605 = vpop.f32.mrf.mxu0
      %v1606 = vpop.f32.mrf.mxu0
      %v1607 = vadd.f32 0.0, %v1606
      %v1608 = vpop.f32.mrf.mxu0
      %1609 = vdwg.mxu0
      %v1610 = vlaneseq
      %v1611 = vand.u32 %v1610, 127
      %vm1612 = vcmp.lt.s32.totalorder %v1611, 8
      %v1613 = vsel %vm1612, %v1548, -1e+30
      %v1614 = vsel %vm1612, %v1551, -1e+30
      %v1615 = vsel %vm1612, %v1556, -1e+30
      %v1616 = vsel %vm1612, %v1559, -1e+30
      %v1617 = vsel %vm1612, %v1564, -1e+30
      %v1618 = vsel %vm1612, %v1567, -1e+30
      %v1619 = vsel %vm1612, %v1572, -1e+30
      %v1620 = vsel %vm1612, %v1575, -1e+30
      %v1621 = vsel %vm1612, %v1580, -1e+30
      %v1622 = vsel %vm1612, %v1583, -1e+30
      %v1623 = vsel %vm1612, %v1588, -1e+30
      %v1624 = vsel %vm1612, %v1591, -1e+30
      %v1625 = vsel %vm1612, %v1596, -1e+30
      %v1626 = vsel %vm1612, %v1599, -1e+30
      %v1627 = vsel %vm1612, %v1604, -1e+30
      %v1628 = vsel %vm1612, %v1607, -1e+30
      %1629 = vmax.xlane.f32.xlu0 %v1613
      %v1630 = vpop.xlane.xlu0 %1629
      %1631 = vmax.xlane.f32.xlu0 %v1614
      %v1632 = vpop.xlane.xlu0 %1631
      %1633 = vmax.xlane.f32.xlu0 %v1615
      %v1634 = vpop.xlane.xlu0 %1633
      %1635 = vmax.xlane.f32.xlu0 %v1616
      %v1636 = vpop.xlane.xlu0 %1635
      %1637 = vmax.xlane.f32.xlu0 %v1617
      %v1638 = vpop.xlane.xlu0 %1637
      %1639 = vmax.xlane.f32.xlu0 %v1618
      %v1640 = vpop.xlane.xlu0 %1639
      %1641 = vmax.xlane.f32.xlu0 %v1619
      %v1642 = vpop.xlane.xlu0 %1641
      %1643 = vmax.xlane.f32.xlu0 %v1620
      %v1644 = vpop.xlane.xlu0 %1643
      %1645 = vmax.xlane.f32.xlu0 %v1621
      %v1646 = vpop.xlane.xlu0 %1645
      %1647 = vmax.xlane.f32.xlu0 %v1622
      %v1648 = vpop.xlane.xlu0 %1647
      %1649 = vmax.xlane.f32.xlu0 %v1623
      %v1650 = vpop.xlane.xlu0 %1649
      %1651 = vmax.xlane.f32.xlu0 %v1624
      %v1652 = vpop.xlane.xlu0 %1651
      %1653 = vmax.xlane.f32.xlu0 %v1625
      %v1654 = vpop.xlane.xlu0 %1653
      %1655 = vmax.xlane.f32.xlu0 %v1626
      %v1656 = vpop.xlane.xlu0 %1655
      %1657 = vmax.xlane.f32.xlu0 %v1627
      %v1658 = vpop.xlane.xlu0 %1657
      %1659 = vmax.xlane.f32.xlu0 %v1628
      %v1660 = vpop.xlane.xlu0 %1659
      %v1661 = vsub.f32 %v1613, %v1630
      %v1662 = vsub.f32 %v1614, %v1632
      %v1663 = vsub.f32 %v1615, %v1634
      %v1664 = vsub.f32 %v1616, %v1636
      %v1665 = vsub.f32 %v1617, %v1638
      %v1666 = vsub.f32 %v1618, %v1640
      %v1667 = vsub.f32 %v1619, %v1642
      %v1668 = vsub.f32 %v1620, %v1644
      %v1669 = vsub.f32 %v1621, %v1646
      %v1670 = vsub.f32 %v1622, %v1648
      %v1671 = vsub.f32 %v1623, %v1650
      %v1672 = vsub.f32 %v1624, %v1652
      %v1673 = vsub.f32 %v1625, %v1654
      %v1674 = vsub.f32 %v1626, %v1656
      %v1675 = vsub.f32 %v1627, %v1658
      %v1676 = vsub.f32 %v1628, %v1660
      %v1677 = vmul.f32 %v1661, 1.442695
      %v1678 = vpow.pop %v1677
      %v1679 = vmul.f32 %v1662, 1.442695
      %v1680 = vpow.pop %v1679
      %v1681 = vmul.f32 %v1663, 1.442695
      %v1682 = vpow.pop %v1681
      %v1683 = vmul.f32 %v1664, 1.442695
      %v1684 = vpow.pop %v1683
      %v1685 = vmul.f32 %v1665, 1.442695
      %v1686 = vpow.pop %v1685
      %v1687 = vmul.f32 %v1666, 1.442695
      %v1688 = vpow.pop %v1687
      %v1689 = vmul.f32 %v1667, 1.442695
      %v1690 = vpow.pop %v1689
      %v1691 = vmul.f32 %v1668, 1.442695
      %v1692 = vpow.pop %v1691
      %v1693 = vmul.f32 %v1669, 1.442695
      %v1694 = vpow.pop %v1693
      %v1695 = vmul.f32 %v1670, 1.442695
      %v1696 = vpow.pop %v1695
      %v1697 = vmul.f32 %v1671, 1.442695
      %v1698 = vpow.pop %v1697
      %v1699 = vmul.f32 %v1672, 1.442695
      %v1700 = vpow.pop %v1699
      %v1701 = vmul.f32 %v1673, 1.442695
      %v1702 = vpow.pop %v1701
      %v1703 = vmul.f32 %v1674, 1.442695
      %v1704 = vpow.pop %v1703
      %v1705 = vmul.f32 %v1675, 1.442695
      %v1706 = vpow.pop %v1705
      %v1707 = vmul.f32 %v1676, 1.442695
      %v1708 = vpow.pop %v1707
      %1709 = vadd.xlane.f32.xlu0 %v1678
      %v1710 = vpop.xlane.xlu0 %1709
      %1711 = vadd.xlane.f32.xlu0 %v1680
      %v1712 = vpop.xlane.xlu0 %1711
      %1713 = vadd.xlane.f32.xlu0 %v1682
      %v1714 = vpop.xlane.xlu0 %1713
      %1715 = vadd.xlane.f32.xlu0 %v1684
      %v1716 = vpop.xlane.xlu0 %1715
      %1717 = vadd.xlane.f32.xlu0 %v1686
      %v1718 = vpop.xlane.xlu0 %1717
      %1719 = vadd.xlane.f32.xlu0 %v1688
      %v1720 = vpop.xlane.xlu0 %1719
      %1721 = vadd.xlane.f32.xlu0 %v1690
      %v1722 = vpop.xlane.xlu0 %1721
      %1723 = vadd.xlane.f32.xlu0 %v1692
      %v1724 = vpop.xlane.xlu0 %1723
      %1725 = vadd.xlane.f32.xlu0 %v1694
      %v1726 = vpop.xlane.xlu0 %1725
      %1727 = vadd.xlane.f32.xlu0 %v1696
      %v1728 = vpop.xlane.xlu0 %1727
      %1729 = vadd.xlane.f32.xlu0 %v1698
      %v1730 = vpop.xlane.xlu0 %1729
      %1731 = vadd.xlane.f32.xlu0 %v1700
      %v1732 = vpop.xlane.xlu0 %1731
      %1733 = vadd.xlane.f32.xlu0 %v1702
      %v1734 = vpop.xlane.xlu0 %1733
      %1735 = vadd.xlane.f32.xlu0 %v1704
      %v1736 = vpop.xlane.xlu0 %1735
      %1737 = vadd.xlane.f32.xlu0 %v1706
      %v1738 = vpop.xlane.xlu0 %1737
      %1739 = vadd.xlane.f32.xlu0 %v1708
      %v1740 = vpop.xlane.xlu0 %1739
      %v1741 = vrcp.pop %v1710
      %v1742 = vrcp.pop %v1712
      %v1743 = vrcp.pop %v1714
      %v1744 = vrcp.pop %v1716
      %v1745 = vrcp.pop %v1718
      %v1746 = vrcp.pop %v1720
      %v1747 = vrcp.pop %v1722
      %v1748 = vrcp.pop %v1724
      %v1749 = vrcp.pop %v1726
      %v1750 = vrcp.pop %v1728
      %v1751 = vrcp.pop %v1730
      %v1752 = vrcp.pop %v1732
      %v1753 = vrcp.pop %v1734
      %v1754 = vrcp.pop %v1736
      %v1755 = vrcp.pop %v1738
      %v1756 = vrcp.pop %v1740
      %v1757 = vmul.f32 %v1678, %v1741
      %v1758 = vmul.f32 %v1680, %v1742
      %v1759 = vmul.f32 %v1682, %v1743
      %v1760 = vmul.f32 %v1684, %v1744
      %v1761 = vmul.f32 %v1686, %v1745
      %v1762 = vmul.f32 %v1688, %v1746
      %v1763 = vmul.f32 %v1690, %v1747
      %v1764 = vmul.f32 %v1692, %v1748
      %v1765 = vmul.f32 %v1694, %v1749
      %v1766 = vmul.f32 %v1696, %v1750
      %v1767 = vmul.f32 %v1698, %v1751
      %v1768 = vmul.f32 %v1700, %v1752
      %v1769 = vmul.f32 %v1702, %v1753
      %v1770 = vmul.f32 %v1704, %v1754
      %v1771 = vmul.f32 %v1706, %v1755
      %v1772 = vmul.f32 %v1708, %v1756
      %v1773 = vpack.c.bf16 %v1758, %v1757
      %v1774 = vpack.c.bf16 %v1760, %v1759
      %v1775 = vpack.c.bf16 %v1762, %v1761
      %v1776 = vpack.c.bf16 %v1764, %v1763
      %v1777 = vpack.c.bf16 %v1766, %v1765
      %v1778 = vpack.c.bf16 %v1768, %v1767
      %v1779 = vpack.c.bf16 %v1770, %v1769
      %v1780 = vpack.c.bf16 %v1772, %v1771
      %v1781 = vpack.c.bf16 %v1482, %v1481
      %v1782 = vpack.c.bf16 %v1484, %v1483
      %v1783 = vpack.c.bf16 %v1486, %v1485
      %v1784 = vpack.c.bf16 %v1488, %v1487
      %v1785 = vpack.c.bf16 %v1490, %v1489
      %v1786 = vpack.c.bf16 %v1492, %v1491
      %v1787 = vpack.c.bf16 %v1494, %v1493
      %v1788 = vpack.c.bf16 %v1496, %v1495
      %1789 = vmatprep.subr.bf16.mxu0 0
      %1790 = vmatpush1.bf16.msra.mxu0 %v1788
      %1791 = vmatprep.subr.bf16.mxu0 0
      %1792 = vmatpush1.bf16.msra.mxu0 %v1787
      %1793 = vmatprep.subr.bf16.mxu0 0
      %1794 = vmatpush1.bf16.msra.mxu0 %v1786
      %1795 = vmatprep.subr.bf16.mxu0 0
      %1796 = vmatpush1.bf16.msra.mxu0 %v1785
      %1797 = vmatprep.subr.bf16.mxu0 0
      %1798 = vmatpush1.bf16.msra.mxu0 %v1784
      %1799 = vmatprep.subr.bf16.mxu0 0
      %1800 = vmatpush1.bf16.msra.mxu0 %v1783
      %1801 = vmatprep.subr.bf16.mxu0 0
      %1802 = vmatpush1.bf16.msra.mxu0 %v1782
      %1803 = vmatprep.subr.bf16.mxu0 0
      %1804 = vmatpush1.bf16.msra.mxu0 %v1781
      %1805 = vmatprep.subr.bf16.mxu0 0
      %1806 = vmatpush2.bf16.msra.mxu0 0
      %1807 = vmatprep.subr.bf16.mxu0 0
      %1808 = vmatpush2.bf16.msra.mxu0 0
      %1809 = vmatprep.subr.bf16.mxu0 0
      %1810 = vmatpush2.bf16.msra.mxu0 0
      %1811 = vmatprep.subr.bf16.mxu0 0
      %1812 = vmatpush2.bf16.msra.mxu0 0
      %1813 = vmatprep.subr.bf16.mxu0 0
      %1814 = vmatpush2.bf16.msra.mxu0 0
      %1815 = vmatprep.subr.bf16.mxu0 0
      %1816 = vmatpush2.bf16.msra.mxu0 0
      %1817 = vmatprep.subr.bf16.mxu0 0
      %1818 = vmatpush2.bf16.msra.mxu0 0
      %1819 = vmatprep.subr.bf16.mxu0 0
      %1820 = vmatpush2.bf16.msra.mxu0 0
      %1821 = vmatprep.mubr.bf16.mxu0 0
      %1822 = vmatmul.mubr.bf16.gmra.mxu0 %v1773
      %v1823 = vpop.f32.mrf.mxu0
      %v1824 = vadd.f32 0.0, %v1823
      %v1825 = vpop.f32.mrf.mxu0
      %v1826 = vpop.f32.mrf.mxu0
      %v1827 = vadd.f32 0.0, %v1826
      %v1828 = vpop.f32.mrf.mxu0
      %1829 = vmatprep.mubr.bf16.mxu0 0
      %1830 = vmatmul.mubr.bf16.gmra.mxu0 %v1774
      %v1831 = vpop.f32.mrf.mxu0
      %v1832 = vadd.f32 0.0, %v1831
      %v1833 = vpop.f32.mrf.mxu0
      %v1834 = vpop.f32.mrf.mxu0
      %v1835 = vadd.f32 0.0, %v1834
      %v1836 = vpop.f32.mrf.mxu0
      %1837 = vmatprep.mubr.bf16.mxu0 0
      %1838 = vmatmul.mubr.bf16.gmra.mxu0 %v1775
      %v1839 = vpop.f32.mrf.mxu0
      %v1840 = vadd.f32 0.0, %v1839
      %v1841 = vpop.f32.mrf.mxu0
      %v1842 = vpop.f32.mrf.mxu0
      %v1843 = vadd.f32 0.0, %v1842
      %v1844 = vpop.f32.mrf.mxu0
      %1845 = vmatprep.mubr.bf16.mxu0 0
      %1846 = vmatmul.mubr.bf16.gmra.mxu0 %v1776
      %v1847 = vpop.f32.mrf.mxu0
      %v1848 = vadd.f32 0.0, %v1847
      %v1849 = vpop.f32.mrf.mxu0
      %v1850 = vpop.f32.mrf.mxu0
      %v1851 = vadd.f32 0.0, %v1850
      %v1852 = vpop.f32.mrf.mxu0
      %1853 = vmatprep.mubr.bf16.mxu0 0
      %1854 = vmatmul.mubr.bf16.gmra.mxu0 %v1777
      %v1855 = vpop.f32.mrf.mxu0
      %v1856 = vadd.f32 0.0, %v1855
      %v1857 = vpop.f32.mrf.mxu0
      %v1858 = vpop.f32.mrf.mxu0
      %v1859 = vadd.f32 0.0, %v1858
      %v1860 = vpop.f32.mrf.mxu0
      %1861 = vmatprep.mubr.bf16.mxu0 0
      %1862 = vmatmul.mubr.bf16.gmra.mxu0 %v1778
      %v1863 = vpop.f32.mrf.mxu0
      %v1864 = vadd.f32 0.0, %v1863
      %v1865 = vpop.f32.mrf.mxu0
      %v1866 = vpop.f32.mrf.mxu0
      %v1867 = vadd.f32 0.0, %v1866
      %v1868 = vpop.f32.mrf.mxu0
      %1869 = vmatprep.mubr.bf16.mxu0 0
      %1870 = vmatmul.mubr.bf16.gmra.mxu0 %v1779
      %v1871 = vpop.f32.mrf.mxu0
      %v1872 = vadd.f32 0.0, %v1871
      %v1873 = vpop.f32.mrf.mxu0
      %v1874 = vpop.f32.mrf.mxu0
      %v1875 = vadd.f32 0.0, %v1874
      %v1876 = vpop.f32.mrf.mxu0
      %1877 = vmatprep.mubr.bf16.mxu0 0
      %1878 = vmatmul.mubr.bf16.gmra.mxu0 %v1780
      %v1879 = vpop.f32.mrf.mxu0
      %v1880 = vadd.f32 0.0, %v1879
      %v1881 = vpop.f32.mrf.mxu0
      %v1882 = vpop.f32.mrf.mxu0
      %v1883 = vadd.f32 0.0, %v1882
      %v1884 = vpop.f32.mrf.mxu0
      %1885 = vdwg.mxu0
      %v1886 = vpack.c.bf16 %v1827, %v1824
      %v1887 = vpack.c.bf16 %v1835, %v1832
      %v1888 = vpack.c.bf16 %v1843, %v1840
      %v1889 = vpack.c.bf16 %v1851, %v1848
      %v1890 = vpack.c.bf16 %v1859, %v1856
      %v1891 = vpack.c.bf16 %v1867, %v1864
      %v1892 = vpack.c.bf16 %v1875, %v1872
      %v1893 = vpack.c.bf16 %v1883, %v1880
      %v1894 = vld [vmem:[%s7] sm:$0xf]
      %v1895 = vld [vmem:[%s7 + $0x4] sm:$0xf]
      %v1896 = vld [vmem:[%s7 + $0x8] sm:$0xf]
      %v1897 = vld [vmem:[%s7 + $0xc] sm:$0xf]
      %v1898 = vld [vmem:[%s7 + $0x10] sm:$0xf]
      %v1899 = vld [vmem:[%s7 + $0x14] sm:$0xf]
      %v1900 = vld [vmem:[%s7 + $0x18] sm:$0xf]
      %v1901 = vld [vmem:[%s7 + $0x1c] sm:$0xf]
      %v1902 = vld [vmem:[%s7 + $0x20] sm:$0xf]
      %v1903 = vld [vmem:[%s7 + $0x24] sm:$0xf]
      %v1904 = vld [vmem:[%s7 + $0x28] sm:$0xf]
      %v1905 = vld [vmem:[%s7 + $0x2c] sm:$0xf]
      %v1906 = vld [vmem:[%s7 + $0x30] sm:$0xf]
      %v1907 = vld [vmem:[%s7 + $0x34] sm:$0xf]
      %v1908 = vld [vmem:[%s7 + $0x38] sm:$0xf]
      %v1909 = vld [vmem:[%s7 + $0x3c] sm:$0xf]
      %v1910 = vlaneseq
      %v1911 = vshrl.u32 %v1910, 7
      %v1912 = vsub.s32 5, %v1911
      %v1913 = vrot.slane %v479, %v1912
      %v1930 = vunpack.c.l.b16 %v1894
      %v1931 = vunpack.c.l.b16 %v1895
      %v1932 = vunpack.c.l.b16 %v1896
      %v1933 = vunpack.c.l.b16 %v1897
      %v1934 = vunpack.c.l.b16 %v1898
      %v1935 = vunpack.c.l.b16 %v1899
      %v1936 = vunpack.c.l.b16 %v1900
      %v1937 = vunpack.c.l.b16 %v1901
      %v1938 = vunpack.c.l.b16 %v1902
      %v1939 = vunpack.c.l.b16 %v1903
      %v1940 = vunpack.c.l.b16 %v1904
      %v1941 = vunpack.c.l.b16 %v1905
      %v1942 = vunpack.c.l.b16 %v1906
      %v1943 = vunpack.c.l.b16 %v1907
      %v1944 = vunpack.c.l.b16 %v1908
      %v1945 = vunpack.c.l.b16 %v1909
      %v1946 = vpack.c.b16 %v1931, %v1930
      %v1947 = vpack.c.b16 %v1933, %v1932
      %v1948 = vpack.c.b16 %v1935, %v1934
      %v1949 = vpack.c.b16 %v1937, %v1936
      %v1950 = vpack.c.b16 %v1939, %v1938
      %v1951 = vpack.c.b16 %v1941, %v1940
      %v1952 = vpack.c.b16 %v1943, %v1942
      %v1953 = vpack.c.b16 %v1945, %v1944
      %1962 = vmatprep.subr.bf16.mxu0 0
      %1963 = vmatpush1.bf16.msra.mxu0 %v1953
      %1964 = vmatprep.subr.bf16.mxu0 0
      %1965 = vmatpush1.bf16.msra.mxu0 %v1952
      %1966 = vmatprep.subr.bf16.mxu0 0
      %1967 = vmatpush1.bf16.msra.mxu0 %v1951
      %1968 = vmatprep.subr.bf16.mxu0 0
      %1969 = vmatpush1.bf16.msra.mxu0 %v1950
      %1970 = vmatprep.subr.bf16.mxu0 0
      %1971 = vmatpush1.bf16.msra.mxu0 %v1949
      %1972 = vmatprep.subr.bf16.mxu0 0
      %1973 = vmatpush1.bf16.msra.mxu0 %v1948
      %1974 = vmatprep.subr.bf16.mxu0 0
      %1975 = vmatpush1.bf16.msra.mxu0 %v1947
      %1976 = vmatprep.subr.bf16.mxu0 0
      %1977 = vmatpush1.bf16.msra.mxu0 %v1946
      %1978 = vmatprep.subr.bf16.mxu0 0
      %1979 = vmatpush2.bf16.msra.mxu0 0
      %1980 = vmatprep.subr.bf16.mxu0 0
      %1981 = vmatpush2.bf16.msra.mxu0 0
      %1982 = vmatprep.subr.bf16.mxu0 0
      %1983 = vmatpush2.bf16.msra.mxu0 0
      %1984 = vmatprep.subr.bf16.mxu0 0
      %1985 = vmatpush2.bf16.msra.mxu0 0
      %1986 = vmatprep.subr.bf16.mxu0 0
      %1987 = vmatpush2.bf16.msra.mxu0 0
      %1988 = vmatprep.subr.bf16.mxu0 0
      %1989 = vmatpush2.bf16.msra.mxu0 0
      %1990 = vmatprep.subr.bf16.mxu0 0
      %1991 = vmatpush2.bf16.msra.mxu0 0
      %1992 = vmatprep.subr.bf16.mxu0 0
      %1993 = vmatpush2.bf16.msra.mxu0 0
      %1994 = vmatprep.mubr.bf16.mxu0 0
      %1995 = vmatmul.mubr.bf16.gmra.mxu0 %v1886
      %v1996 = vpop.f32.mrf.mxu0
      %v1997 = vadd.f32 %v1913, %v1996
      %v1998 = vpop.f32.mrf.mxu0
      %v1999 = vpop.f32.mrf.mxu0
      %v2000 = vadd.f32 %v1913, %v1999
      %v2001 = vpop.f32.mrf.mxu0
      %2002 = vmatprep.mubr.bf16.mxu0 0
      %2003 = vmatmul.mubr.bf16.gmra.mxu0 %v1887
      %v2004 = vpop.f32.mrf.mxu0
      %v2005 = vadd.f32 %v1913, %v2004
      %v2006 = vpop.f32.mrf.mxu0
      %v2007 = vpop.f32.mrf.mxu0
      %v2008 = vadd.f32 %v1913, %v2007
      %v2009 = vpop.f32.mrf.mxu0
      %2010 = vmatprep.mubr.bf16.mxu0 0
      %2011 = vmatmul.mubr.bf16.gmra.mxu0 %v1888
      %v2012 = vpop.f32.mrf.mxu0
      %v2013 = vadd.f32 %v1913, %v2012
      %v2014 = vpop.f32.mrf.mxu0
      %v2015 = vpop.f32.mrf.mxu0
      %v2016 = vadd.f32 %v1913, %v2015
      %v2017 = vpop.f32.mrf.mxu0
      %2018 = vmatprep.mubr.bf16.mxu0 0
      %2019 = vmatmul.mubr.bf16.gmra.mxu0 %v1889
      %v2020 = vpop.f32.mrf.mxu0
      %v2021 = vadd.f32 %v1913, %v2020
      %v2022 = vpop.f32.mrf.mxu0
      %v2023 = vpop.f32.mrf.mxu0
      %v2024 = vadd.f32 %v1913, %v2023
      %v2025 = vpop.f32.mrf.mxu0
      %2026 = vmatprep.mubr.bf16.mxu0 0
      %2027 = vmatmul.mubr.bf16.gmra.mxu0 %v1890
      %v2028 = vpop.f32.mrf.mxu0
      %v2029 = vadd.f32 %v1913, %v2028
      %v2030 = vpop.f32.mrf.mxu0
      %v2031 = vpop.f32.mrf.mxu0
      %v2032 = vadd.f32 %v1913, %v2031
      %v2033 = vpop.f32.mrf.mxu0
      %2034 = vmatprep.mubr.bf16.mxu0 0
      %2035 = vmatmul.mubr.bf16.gmra.mxu0 %v1891
      %v2036 = vpop.f32.mrf.mxu0
      %v2037 = vadd.f32 %v1913, %v2036
      %v2038 = vpop.f32.mrf.mxu0
      %v2039 = vpop.f32.mrf.mxu0
      %v2040 = vadd.f32 %v1913, %v2039
      %v2041 = vpop.f32.mrf.mxu0
      %2042 = vmatprep.mubr.bf16.mxu0 0
      %2043 = vmatmul.mubr.bf16.gmra.mxu0 %v1892
      %v2044 = vpop.f32.mrf.mxu0
      %v2045 = vadd.f32 %v1913, %v2044
      %v2046 = vpop.f32.mrf.mxu0
      %v2047 = vpop.f32.mrf.mxu0
      %v2048 = vadd.f32 %v1913, %v2047
      %v2049 = vpop.f32.mrf.mxu0
      %2050 = vmatprep.mubr.bf16.mxu0 0
      %2051 = vmatmul.mubr.bf16.gmra.mxu0 %v1893
      %v2052 = vpop.f32.mrf.mxu0
      %v2053 = vadd.f32 %v1913, %v2052
      %v2054 = vpop.f32.mrf.mxu0
      %v2055 = vpop.f32.mrf.mxu0
      %v2056 = vadd.f32 %v1913, %v2055
      %v2057 = vpop.f32.mrf.mxu0
      %2058 = vdwg.mxu0
      %v2059 = vmax.f32 %v1997, 0.0
      %v2060 = vmax.f32 %v2000, 0.0
      %v2061 = vmax.f32 %v2005, 0.0
      %v2062 = vmax.f32 %v2008, 0.0
      %v2063 = vmax.f32 %v2013, 0.0
      %v2064 = vmax.f32 %v2016, 0.0
      %v2065 = vmax.f32 %v2021, 0.0
      %v2066 = vmax.f32 %v2024, 0.0
      %v2067 = vmax.f32 %v2029, 0.0
      %v2068 = vmax.f32 %v2032, 0.0
      %v2069 = vmax.f32 %v2037, 0.0
      %v2070 = vmax.f32 %v2040, 0.0
      %v2071 = vmax.f32 %v2045, 0.0
      %v2072 = vmax.f32 %v2048, 0.0
      %v2073 = vmax.f32 %v2053, 0.0
      %v2074 = vmax.f32 %v2056, 0.0
      %v2075 = vld [vmem:[%s8] sm:$0xf]
      %v2076 = vld [vmem:[%s8 + $0x4] sm:$0xf]
      %v2077 = vld [vmem:[%s8 + $0x8] sm:$0xf]
      %v2078 = vld [vmem:[%s8 + $0xc] sm:$0xf]
      %v2079 = vld [vmem:[%s8 + $0x10] sm:$0xf]
      %v2080 = vld [vmem:[%s8 + $0x14] sm:$0xf]
      %v2081 = vld [vmem:[%s8 + $0x18] sm:$0xf]
      %v2082 = vld [vmem:[%s8 + $0x1c] sm:$0xf]
      %v2083 = vld [vmem:[%s8 + $0x20] sm:$0xf]
      %v2084 = vld [vmem:[%s8 + $0x24] sm:$0xf]
      %v2085 = vld [vmem:[%s8 + $0x28] sm:$0xf]
      %v2086 = vld [vmem:[%s8 + $0x2c] sm:$0xf]
      %v2087 = vld [vmem:[%s8 + $0x30] sm:$0xf]
      %v2088 = vld [vmem:[%s8 + $0x34] sm:$0xf]
      %v2089 = vld [vmem:[%s8 + $0x38] sm:$0xf]
      %v2090 = vld [vmem:[%s8 + $0x3c] sm:$0xf]
      %v2091 = vpack.c.bf16 %v2060, %v2059
      %v2092 = vpack.c.bf16 %v2062, %v2061
      %v2093 = vpack.c.bf16 %v2064, %v2063
      %v2094 = vpack.c.bf16 %v2066, %v2065
      %v2095 = vpack.c.bf16 %v2068, %v2067
      %v2096 = vpack.c.bf16 %v2070, %v2069
      %v2097 = vpack.c.bf16 %v2072, %v2071
      %v2098 = vpack.c.bf16 %v2074, %v2073
      %v2099 = vld [vmem:[%s9] sm:$0xf]
      %v2100 = vld [vmem:[%s9 + $0x4] sm:$0xf]
      %v2101 = vld [vmem:[%s9 + $0x8] sm:$0xf]
      %v2102 = vld [vmem:[%s9 + $0xc] sm:$0xf]
      %v2103 = vld [vmem:[%s9 + $0x10] sm:$0xf]
      %v2104 = vld [vmem:[%s9 + $0x14] sm:$0xf]
      %v2105 = vld [vmem:[%s9 + $0x18] sm:$0xf]
      %v2106 = vld [vmem:[%s9 + $0x1c] sm:$0xf]
      %v2107 = vld [vmem:[%s9 + $0x20] sm:$0xf]
      %v2108 = vld [vmem:[%s9 + $0x24] sm:$0xf]
      %v2109 = vld [vmem:[%s9 + $0x28] sm:$0xf]
      %v2110 = vld [vmem:[%s9 + $0x2c] sm:$0xf]
      %v2111 = vld [vmem:[%s9 + $0x30] sm:$0xf]
      %v2112 = vld [vmem:[%s9 + $0x34] sm:$0xf]
      %v2113 = vld [vmem:[%s9 + $0x38] sm:$0xf]
      %v2114 = vld [vmem:[%s9 + $0x3c] sm:$0xf]
      %v2131 = vunpack.c.l.b16 %v2099
      %v2132 = vunpack.c.l.b16 %v2100
      %v2133 = vunpack.c.l.b16 %v2101
      %v2134 = vunpack.c.l.b16 %v2102
      %v2135 = vunpack.c.l.b16 %v2103
      %v2136 = vunpack.c.l.b16 %v2104
      %v2137 = vunpack.c.l.b16 %v2105
      %v2138 = vunpack.c.l.b16 %v2106
      %v2139 = vunpack.c.l.b16 %v2107
      %v2140 = vunpack.c.l.b16 %v2108
      %v2141 = vunpack.c.l.b16 %v2109
      %v2142 = vunpack.c.l.b16 %v2110
      %v2143 = vunpack.c.l.b16 %v2111
      %v2144 = vunpack.c.l.b16 %v2112
      %v2145 = vunpack.c.l.b16 %v2113
      %v2146 = vunpack.c.l.b16 %v2114
      %v2147 = vpack.c.b16 %v2132, %v2131
      %v2148 = vpack.c.b16 %v2134, %v2133
      %v2149 = vpack.c.b16 %v2136, %v2135
      %v2150 = vpack.c.b16 %v2138, %v2137
      %v2151 = vpack.c.b16 %v2140, %v2139
      %v2152 = vpack.c.b16 %v2142, %v2141
      %v2153 = vpack.c.b16 %v2144, %v2143
      %v2154 = vpack.c.b16 %v2146, %v2145
      %2163 = vmatprep.subr.bf16.mxu0 0
      %2164 = vmatpush1.bf16.msra.mxu0 %v2154
      %2165 = vmatprep.subr.bf16.mxu0 0
      %2166 = vmatpush1.bf16.msra.mxu0 %v2153
      %2167 = vmatprep.subr.bf16.mxu0 0
      %2168 = vmatpush1.bf16.msra.mxu0 %v2152
      %2169 = vmatprep.subr.bf16.mxu0 0
      %2170 = vmatpush1.bf16.msra.mxu0 %v2151
      %2171 = vmatprep.subr.bf16.mxu0 0
      %2172 = vmatpush1.bf16.msra.mxu0 %v2150
      %2173 = vmatprep.subr.bf16.mxu0 0
      %2174 = vmatpush1.bf16.msra.mxu0 %v2149
      %2175 = vmatprep.subr.bf16.mxu0 0
      %2176 = vmatpush1.bf16.msra.mxu0 %v2148
      %2177 = vmatprep.subr.bf16.mxu0 0
      %2178 = vmatpush1.bf16.msra.mxu0 %v2147
      %2179 = vmatprep.subr.bf16.mxu0 0
      %2180 = vmatpush2.bf16.msra.mxu0 0
      %2181 = vmatprep.subr.bf16.mxu0 0
      %2182 = vmatpush2.bf16.msra.mxu0 0
      %2183 = vmatprep.subr.bf16.mxu0 0
      %2184 = vmatpush2.bf16.msra.mxu0 0
      %2185 = vmatprep.subr.bf16.mxu0 0
      %2186 = vmatpush2.bf16.msra.mxu0 0
      %2187 = vmatprep.subr.bf16.mxu0 0
      %2188 = vmatpush2.bf16.msra.mxu0 0
      %2189 = vmatprep.subr.bf16.mxu0 0
      %2190 = vmatpush2.bf16.msra.mxu0 0
      %2191 = vmatprep.subr.bf16.mxu0 0
      %2192 = vmatpush2.bf16.msra.mxu0 0
      %2193 = vmatprep.subr.bf16.mxu0 0
      %2194 = vmatpush2.bf16.msra.mxu0 0
      %2195 = vmatprep.mubr.bf16.mxu0 0
      %2196 = vmatmul.mubr.bf16.gmra.mxu0 %v2091
      %v2197 = vpop.f32.mrf.mxu0
      %v2198 = vadd.f32 0.0, %v2197
      %v2199 = vpop.f32.mrf.mxu0
      %v2200 = vpop.f32.mrf.mxu0
      %v2201 = vadd.f32 0.0, %v2200
      %v2202 = vpop.f32.mrf.mxu0
      %2203 = vmatprep.mubr.bf16.mxu0 0
      %2204 = vmatmul.mubr.bf16.gmra.mxu0 %v2092
      %v2205 = vpop.f32.mrf.mxu0
      %v2206 = vadd.f32 0.0, %v2205
      %v2207 = vpop.f32.mrf.mxu0
      %v2208 = vpop.f32.mrf.mxu0
      %v2209 = vadd.f32 0.0, %v2208
      %v2210 = vpop.f32.mrf.mxu0
      %2211 = vmatprep.mubr.bf16.mxu0 0
      %2212 = vmatmul.mubr.bf16.gmra.mxu0 %v2093
      %v2213 = vpop.f32.mrf.mxu0
      %v2214 = vadd.f32 0.0, %v2213
      %v2215 = vpop.f32.mrf.mxu0
      %v2216 = vpop.f32.mrf.mxu0
      %v2217 = vadd.f32 0.0, %v2216
      %v2218 = vpop.f32.mrf.mxu0
      %2219 = vmatprep.mubr.bf16.mxu0 0
      %2220 = vmatmul.mubr.bf16.gmra.mxu0 %v2094
      %v2221 = vpop.f32.mrf.mxu0
      %v2222 = vadd.f32 0.0, %v2221
      %v2223 = vpop.f32.mrf.mxu0
      %v2224 = vpop.f32.mrf.mxu0
      %v2225 = vadd.f32 0.0, %v2224
      %v2226 = vpop.f32.mrf.mxu0
      %2227 = vmatprep.mubr.bf16.mxu0 0
      %2228 = vmatmul.mubr.bf16.gmra.mxu0 %v2095
      %v2229 = vpop.f32.mrf.mxu0
      %v2230 = vadd.f32 0.0, %v2229
      %v2231 = vpop.f32.mrf.mxu0
      %v2232 = vpop.f32.mrf.mxu0
      %v2233 = vadd.f32 0.0, %v2232
      %v2234 = vpop.f32.mrf.mxu0
      %2235 = vmatprep.mubr.bf16.mxu0 0
      %2236 = vmatmul.mubr.bf16.gmra.mxu0 %v2096
      %v2237 = vpop.f32.mrf.mxu0
      %v2238 = vadd.f32 0.0, %v2237
      %v2239 = vpop.f32.mrf.mxu0
      %v2240 = vpop.f32.mrf.mxu0
      %v2241 = vadd.f32 0.0, %v2240
      %v2242 = vpop.f32.mrf.mxu0
      %2243 = vmatprep.mubr.bf16.mxu0 0
      %2244 = vmatmul.mubr.bf16.gmra.mxu0 %v2097
      %v2245 = vpop.f32.mrf.mxu0
      %v2246 = vadd.f32 0.0, %v2245
      %v2247 = vpop.f32.mrf.mxu0
      %v2248 = vpop.f32.mrf.mxu0
      %v2249 = vadd.f32 0.0, %v2248
      %v2250 = vpop.f32.mrf.mxu0
      %2251 = vmatprep.mubr.bf16.mxu0 0
      %2252 = vmatmul.mubr.bf16.gmra.mxu0 %v2098
      %v2253 = vpop.f32.mrf.mxu0
      %v2254 = vadd.f32 0.0, %v2253
      %v2255 = vpop.f32.mrf.mxu0
      %v2256 = vpop.f32.mrf.mxu0
      %v2257 = vadd.f32 0.0, %v2256
      %v2258 = vpop.f32.mrf.mxu0
      %2259 = vdwg.mxu0
      %v2276 = vunpack.c.l.b16 %v2075
      %v2277 = vunpack.c.l.b16 %v2076
      %v2278 = vunpack.c.l.b16 %v2077
      %v2279 = vunpack.c.l.b16 %v2078
      %v2280 = vunpack.c.l.b16 %v2079
      %v2281 = vunpack.c.l.b16 %v2080
      %v2282 = vunpack.c.l.b16 %v2081
      %v2283 = vunpack.c.l.b16 %v2082
      %v2284 = vunpack.c.l.b16 %v2083
      %v2285 = vunpack.c.l.b16 %v2084
      %v2286 = vunpack.c.l.b16 %v2085
      %v2287 = vunpack.c.l.b16 %v2086
      %v2288 = vunpack.c.l.b16 %v2087
      %v2289 = vunpack.c.l.b16 %v2088
      %v2290 = vunpack.c.l.b16 %v2089
      %v2291 = vunpack.c.l.b16 %v2090
      %v2292 = vpack.c.b16 %v2277, %v2276
      %v2293 = vpack.c.b16 %v2279, %v2278
      %v2294 = vpack.c.b16 %v2281, %v2280
      %v2295 = vpack.c.b16 %v2283, %v2282
      %v2296 = vpack.c.b16 %v2285, %v2284
      %v2297 = vpack.c.b16 %v2287, %v2286
      %v2298 = vpack.c.b16 %v2289, %v2288
      %v2299 = vpack.c.b16 %v2291, %v2290
      %2308 = vmatprep.subr.bf16.mxu0 0
      %2309 = vmatpush1.bf16.msra.mxu0 %v2299
      %2310 = vmatprep.subr.bf16.mxu0 0
      %2311 = vmatpush1.bf16.msra.mxu0 %v2298
      %2312 = vmatprep.subr.bf16.mxu0 0
      %2313 = vmatpush1.bf16.msra.mxu0 %v2297
      %2314 = vmatprep.subr.bf16.mxu0 0
      %2315 = vmatpush1.bf16.msra.mxu0 %v2296
      %2316 = vmatprep.subr.bf16.mxu0 0
      %2317 = vmatpush1.bf16.msra.mxu0 %v2295
      %2318 = vmatprep.subr.bf16.mxu0 0
      %2319 = vmatpush1.bf16.msra.mxu0 %v2294
      %2320 = vmatprep.subr.bf16.mxu0 0
      %2321 = vmatpush1.bf16.msra.mxu0 %v2293
      %2322 = vmatprep.subr.bf16.mxu0 0
      %2323 = vmatpush1.bf16.msra.mxu0 %v2292
      %2324 = vmatprep.subr.bf16.mxu0 0
      %2325 = vmatpush2.bf16.msra.mxu0 0
      %2326 = vmatprep.subr.bf16.mxu0 0
      %2327 = vmatpush2.bf16.msra.mxu0 0
      %2328 = vmatprep.subr.bf16.mxu0 0
      %2329 = vmatpush2.bf16.msra.mxu0 0
      %2330 = vmatprep.subr.bf16.mxu0 0
      %2331 = vmatpush2.bf16.msra.mxu0 0
      %2332 = vmatprep.subr.bf16.mxu0 0
      %2333 = vmatpush2.bf16.msra.mxu0 0
      %2334 = vmatprep.subr.bf16.mxu0 0
      %2335 = vmatpush2.bf16.msra.mxu0 0
      %2336 = vmatprep.subr.bf16.mxu0 0
      %2337 = vmatpush2.bf16.msra.mxu0 0
      %2338 = vmatprep.subr.bf16.mxu0 0
      %2339 = vmatpush2.bf16.msra.mxu0 0
      %2340 = vmatprep.mubr.bf16.mxu0 0
      %2341 = vmatmul.mubr.bf16.gmra.mxu0 %v532
      %v2342 = vpop.f32.mrf.mxu0
      %v2343 = vadd.f32 %v2198, %v2342
      %v2344 = vpop.f32.mrf.mxu0
      %v2345 = vpop.f32.mrf.mxu0
      %v2346 = vadd.f32 %v2201, %v2345
      %v2347 = vpop.f32.mrf.mxu0
      %2348 = vmatprep.mubr.bf16.mxu0 0
      %2349 = vmatmul.mubr.bf16.gmra.mxu0 %v533
      %v2350 = vpop.f32.mrf.mxu0
      %v2351 = vadd.f32 %v2206, %v2350
      %v2352 = vpop.f32.mrf.mxu0
      %v2353 = vpop.f32.mrf.mxu0
      %v2354 = vadd.f32 %v2209, %v2353
      %v2355 = vpop.f32.mrf.mxu0
      %2356 = vmatprep.mubr.bf16.mxu0 0
      %2357 = vmatmul.mubr.bf16.gmra.mxu0 %v534
      %v2358 = vpop.f32.mrf.mxu0
      %v2359 = vadd.f32 %v2214, %v2358
      %v2360 = vpop.f32.mrf.mxu0
      %v2361 = vpop.f32.mrf.mxu0
      %v2362 = vadd.f32 %v2217, %v2361
      %v2363 = vpop.f32.mrf.mxu0
      %2364 = vmatprep.mubr.bf16.mxu0 0
      %2365 = vmatmul.mubr.bf16.gmra.mxu0 %v535
      %v2366 = vpop.f32.mrf.mxu0
      %v2367 = vadd.f32 %v2222, %v2366
      %v2368 = vpop.f32.mrf.mxu0
      %v2369 = vpop.f32.mrf.mxu0
      %v2370 = vadd.f32 %v2225, %v2369
      %v2371 = vpop.f32.mrf.mxu0
      %2372 = vmatprep.mubr.bf16.mxu0 0
      %2373 = vmatmul.mubr.bf16.gmra.mxu0 %v536
      %v2374 = vpop.f32.mrf.mxu0
      %v2375 = vadd.f32 %v2230, %v2374
      %v2376 = vpop.f32.mrf.mxu0
      %v2377 = vpop.f32.mrf.mxu0
      %v2378 = vadd.f32 %v2233, %v2377
      %v2379 = vpop.f32.mrf.mxu0
      %2380 = vmatprep.mubr.bf16.mxu0 0
      %2381 = vmatmul.mubr.bf16.gmra.mxu0 %v537
      %v2382 = vpop.f32.mrf.mxu0
      %v2383 = vadd.f32 %v2238, %v2382
      %v2384 = vpop.f32.mrf.mxu0
      %v2385 = vpop.f32.mrf.mxu0
      %v2386 = vadd.f32 %v2241, %v2385
      %v2387 = vpop.f32.mrf.mxu0
      %2388 = vmatprep.mubr.bf16.mxu0 0
      %2389 = vmatmul.mubr.bf16.gmra.mxu0 %v538
      %v2390 = vpop.f32.mrf.mxu0
      %v2391 = vadd.f32 %v2246, %v2390
      %v2392 = vpop.f32.mrf.mxu0
      %v2393 = vpop.f32.mrf.mxu0
      %v2394 = vadd.f32 %v2249, %v2393
      %v2395 = vpop.f32.mrf.mxu0
      %2396 = vmatprep.mubr.bf16.mxu0 0
      %2397 = vmatmul.mubr.bf16.gmra.mxu0 %v539
      %v2398 = vpop.f32.mrf.mxu0
      %v2399 = vadd.f32 %v2254, %v2398
      %v2400 = vpop.f32.mrf.mxu0
      %v2401 = vpop.f32.mrf.mxu0
      %v2402 = vadd.f32 %v2257, %v2401
      %v2403 = vpop.f32.mrf.mxu0
      %2404 = vdwg.mxu0
      %v2405 = vlaneseq
      %v2406 = vshrl.u32 %v2405, 7
      %v2407 = vsub.s32 6, %v2406
      %v2408 = vrot.slane %v479, %v2407
      %v2409 = vadd.f32 %v2343, %v2408
      %v2410 = vadd.f32 %v2346, %v2408
      %v2411 = vadd.f32 %v2351, %v2408
      %v2412 = vadd.f32 %v2354, %v2408
      %v2413 = vadd.f32 %v2359, %v2408
      %v2414 = vadd.f32 %v2362, %v2408
      %v2415 = vadd.f32 %v2367, %v2408
      %v2416 = vadd.f32 %v2370, %v2408
      %v2417 = vadd.f32 %v2375, %v2408
      %v2418 = vadd.f32 %v2378, %v2408
      %v2419 = vadd.f32 %v2383, %v2408
      %v2420 = vadd.f32 %v2386, %v2408
      %v2421 = vadd.f32 %v2391, %v2408
      %v2422 = vadd.f32 %v2394, %v2408
      %v2423 = vadd.f32 %v2399, %v2408
      %v2424 = vadd.f32 %v2402, %v2408
      %v2425 = vmax.f32 %v2409, 0.0
      %v2426 = vmax.f32 %v2410, 0.0
      %v2427 = vmax.f32 %v2411, 0.0
      %v2428 = vmax.f32 %v2412, 0.0
      %v2429 = vmax.f32 %v2413, 0.0
      %v2430 = vmax.f32 %v2414, 0.0
      %v2431 = vmax.f32 %v2415, 0.0
      %v2432 = vmax.f32 %v2416, 0.0
      %v2433 = vmax.f32 %v2417, 0.0
      %v2434 = vmax.f32 %v2418, 0.0
      %v2435 = vmax.f32 %v2419, 0.0
      %v2436 = vmax.f32 %v2420, 0.0
      %v2437 = vmax.f32 %v2421, 0.0
      %v2438 = vmax.f32 %v2422, 0.0
      %v2439 = vmax.f32 %v2423, 0.0
      %v2440 = vmax.f32 %v2424, 0.0
      %2441 = vst [vmem:[%s444] sm:$0xff] %v2425
      %2442 = vst [vmem:[%s444 + $0x8] sm:$0xff] %v2426
      %2443 = vst [vmem:[%s444 + $0x10] sm:$0xff] %v2427
      %2444 = vst [vmem:[%s444 + $0x18] sm:$0xff] %v2428
      %2445 = vst [vmem:[%s444 + $0x20] sm:$0xff] %v2429
      %2446 = vst [vmem:[%s444 + $0x28] sm:$0xff] %v2430
      %2447 = vst [vmem:[%s444 + $0x30] sm:$0xff] %v2431
      %2448 = vst [vmem:[%s444 + $0x38] sm:$0xff] %v2432
      %2449 = vst [vmem:[%s444 + $0x40] sm:$0xff] %v2433
      %2450 = vst [vmem:[%s444 + $0x48] sm:$0xff] %v2434
      %2451 = vst [vmem:[%s444 + $0x50] sm:$0xff] %v2435
      %2452 = vst [vmem:[%s444 + $0x58] sm:$0xff] %v2436
      %2453 = vst [vmem:[%s444 + $0x60] sm:$0xff] %v2437
      %2454 = vst [vmem:[%s444 + $0x68] sm:$0xff] %v2438
      %2455 = vst [vmem:[%s444 + $0x70] sm:$0xff] %v2439
      %2456 = vst [vmem:[%s444 + $0x78] sm:$0xff] %v2440
      %s2457 = smul.u32 16, %s27
      %p2458 = scmp.lt.s32.totalorder %s26, 1
      %s2459 = scalar_select %p2458, %s26, 1
      %p2460 = scmp.lt.s32.totalorder %s2457, 31
      %s2461 = scalar_select %p2460, %s2457, 31
      %s2462 = smul.addr %s2459, 32
      %s2463 = sadd.s32 %s2461, %s2462
      %s2464 = smul.addr %s2463, 8
      %s2465 = scalar_lea.vmem %s11, %s2464
      // Predicated region
      $region65: #{spatial_ocr_module.1} parent=63 // pred_check
        %p2466 = pneg %p297
      $region66: #{spatial_ocr_module.1} parent=63 // pred_check_branch
        %2468 = sbr.rel (%p2466) target = $region68
      $region67: #{spatial_ocr_module.1} parent=63 // pred_region
        %s2469 = smul.u32 16, %s27
      $region68: #{spatial_ocr_module.1} parent=63 // pred_fallthru
        _
    $region64: #{spatial_ocr_module.1} parent=5 // pred_fallthru
      _
    %p2470 = scmp.le.s32.totalorder 2, %s17
    // Predicated region
    $region69: #{spatial_ocr_module.1} parent=5 // pred_check
      %p2471 = pneg %p2470
    $region70: #{spatial_ocr_module.1} parent=5 // pred_check_branch
      %2473 = sbr.rel (%p2471) target = $region72
    $region71: #{spatial_ocr_module.1} parent=5 // pred_region
      %s2474 = ssub.s32 %s17, 2
      // Predicated region
      $region73: #{spatial_ocr_module.1} parent=71 // pred_check
        %p2475 = pneg %p303
      $region74: #{spatial_ocr_module.1} parent=71 // pred_check_branch
        %2477 = sbr.rel (%p2475) target = $region76
      $region75: #{spatial_ocr_module.1} parent=71 // pred_region
        %s2478 = smul.u32 16, %s29
        %p2479 = scmp.lt.s32.totalorder %s28, 1
        %s2480 = scalar_select %p2479, %s28, 1
        %p2481 = scmp.lt.s32.totalorder %s2478, 31
        %s2482 = scalar_select %p2481, %s2478, 31
        %s2483 = smul.addr %s2480, 32
        %s2484 = sadd.s32 %s2482, %s2483
        %s2485 = smul.addr %s2484, 8
        %s2486 = scalar_lea.vmem %s11, %s2485
      $region76: #{spatial_ocr_module.1} parent=71 // pred_fallthru
        _
    $region72: #{spatial_ocr_module.1} parent=5 // pred_fallthru
      _
  $region6: #{spatial_ocr_module.1} parent=0 // loop_footer
    %s21 = sadd.s32 1, %s17
  $region7: #{spatial_ocr_module.1} parent=0 // loop_footer_branch
    %16 = sbr.rel target = $region3
  $region8: #{spatial_ocr_module.1} parent=0 // loop_exit
    _

</llo_original>
